<compile_context>
chip_gen: v7x
topology: tpu7x:2x2x1
jax: 0.10.0
libtpu: 0.0.40
codegen_flags: <defaults>
</compile_context>

<pallas_src>
import functools

import jax
import jax.numpy as jnp
from jax import lax
from jax.experimental import pallas as pl
from jax.experimental.pallas import tpu as pltpu

EPS = 1e-5


def _bn_train(v, g, b):
    """Fused train-mode batch-norm on (C, M); stats over M (= N*H*W)."""
    mu = jnp.mean(v, axis=1, keepdims=True)
    ex2 = jnp.mean(v * v, axis=1, keepdims=True)      # same read as mu
    var = ex2 - mu * mu                               # biased var (PyTorch)
    scale = g * lax.rsqrt(var + EPS)                  # rsqrt -> EUP (cheap)
    shift = b - mu * scale
    return v * scale + shift                          # one normalize pass


def bottleneck_kernel(x_ref, g1, b1, w1t_ref, g2, b2, w2t_ref, mask_ref,
                      g3, b3, w3t_ref, g4, b4, o_ref, *, W):
    Cin, M = x_ref.shape
    P = w1t_ref.shape[0]

    x = x_ref[...]                                    # (Cin, M)

    # bn1 -> conv1 (1x1) -> bn2 -> relu
    h = _bn_train(x, g1[...], b1[...])
    h = jnp.dot(w1t_ref[...], h, preferred_element_type=jnp.float32)    # (P, M)
    h = jnp.maximum(_bn_train(h, g2[...], b2[...]), 0.0)

    # conv2: 3x3, stride 1, pad 1 — im2col on the flattened pixel axis.
    # Each tap is a static lane shift by dy*W + dx, zeroed at image edges by a
    # precomputed per-tap mask; the 9 taps are stacked on sublanes and fed to
    # one (P, 9P) @ (9P, M) MXU matmul.
    cols = []
    t = 0
    for oy in (-1, 0, 1):
        for ox in (-1, 0, 1):
            s = oy * W + ox
            shifted = h if s == 0 else jnp.roll(h, -s, axis=1)
            cols.append(shifted * mask_ref[t:t + 1, :])
            t += 1
    patches = jnp.concatenate(cols, axis=0)           # (9P, M)
    h = jnp.dot(w2t_ref[...], patches,
                preferred_element_type=jnp.float32)   # (P, M)

    # bn3 -> relu -> conv3 (1x1) -> bn4
    h = jnp.maximum(_bn_train(h, g3[...], b3[...]), 0.0)
    h = jnp.dot(w3t_ref[...], h, preferred_element_type=jnp.float32)    # (Cout, M)
    h = _bn_train(h, g4[...], b4[...])

    # residual: lane-dense full store, then add the shortcut into the first
    # Cin channel rows (PyramidNet zero-pads the extra channels).
    o_ref[...] = h
    o_ref[:Cin, :] = h[:Cin, :] + x


def bottleneck_pallas(x_nchw, params):
    (g1, b1, w1, g2, b2, w2, g3, b3, w3, g4, b4) = params
    N, Cin, H, W = x_nchw.shape
    P = w1.shape[1]
    Cout = w3.shape[1]
    M = N * H * W

    # CM layout: channels on sublanes, flattened pixels (lane-dense) on lanes.
    xT = x_nchw.transpose(1, 0, 2, 3).reshape(Cin, M)
    w1t = w1.T                           # (P, Cin)
    w2t = w2.reshape(9 * P, P).T         # (P, 9P); rows ordered (ky, kx, cin)
    w3t = w3.T                           # (Cout, P)
    col = lambda a: a.reshape(-1, 1)     # per-channel params broadcast on lanes

    # Per-tap edge-validity masks (9, M): tap (oy, ox) contributes at pixel
    # (h, w) iff 0 <= h+oy < H and 0 <= w+ox < W.  Precomputed here so the
    # kernel does a plain broadcast multiply (no in-kernel div/rem).
    idx = jnp.arange(M, dtype=jnp.int32)
    hh = (idx // W) % H
    ww = idx % W
    masks = []
    for oy in (-1, 0, 1):
        for ox in (-1, 0, 1):
            masks.append((hh + oy >= 0) & (hh + oy < H) &
                         (ww + ox >= 0) & (ww + ox < W))
    tap_mask = jnp.stack(masks).astype(jnp.float32)  # (9, M)

    out_cm = pl.pallas_call(
        functools.partial(bottleneck_kernel, W=W),
        out_shape=jax.ShapeDtypeStruct((Cout, M), jnp.float32),
        in_specs=[pl.BlockSpec(memory_space=pltpu.MemorySpace.VMEM)] * 13,
        out_specs=pl.BlockSpec(memory_space=pltpu.MemorySpace.VMEM),
    )(xT, col(g1), col(b1), w1t, col(g2), col(b2), w2t, tap_mask,
      col(g3), col(b3), w3t, col(g4), col(b4))

    # (Cout, N*H*W) -> module's NCHW convention.
    return out_cm.reshape(Cout, N, H, W).transpose(1, 0, 2, 3)


# -------------------- pure-JAX reference (for verification) ------------------
def bottleneck_ref(x_nhwc, params):
    (g1, b1, w1, g2, b2, w2, g3, b3, w3, g4, b4) = params
    Cin = x_nhwc.shape[-1]
    P = w1.shape[1]
    Cout = w3.shape[1]
    dn = ("NHWC", "HWIO", "NHWC")
    hp = lax.Precision.HIGHEST

    def bn(v, g, b):
        mu = jnp.mean(v, axis=(0, 1, 2), keepdims=True)
        var = jnp.mean((v - mu) ** 2, axis=(0, 1, 2), keepdims=True)
        return (v - mu) * lax.rsqrt(var + EPS) * g.reshape(1, 1, 1, -1) \
            + b.reshape(1, 1, 1, -1)

    out = bn(x_nhwc, g1, b1)
    out = lax.conv_general_dilated(out, w1.reshape(1, 1, Cin, P), (1, 1),
                                   "VALID", dimension_numbers=dn, precision=hp)
    out = jnp.maximum(bn(out, g2, b2), 0.0)
    out = lax.conv_general_dilated(out, w2, (1, 1), "SAME",
                                   dimension_numbers=dn, precision=hp)
    out = jnp.maximum(bn(out, g3, b3), 0.0)
    out = lax.conv_general_dilated(out, w3.reshape(1, 1, P, Cout), (1, 1),
                                   "VALID", dimension_numbers=dn, precision=hp)
    out = bn(out, g4, b4)
    if Cout == Cin:
        return out + x_nhwc
    pad = jnp.zeros(x_nhwc.shape[:3] + (Cout - Cin,), jnp.float32)
    return out + jnp.concatenate([x_nhwc, pad], axis=-1)


# ------------------------------------------------------------------------------
if __name__ == "__main__":
    # Small shapes consistent with the module: inplanes=4, planes=8 -> out=32.
    N, Cin, H, W = 2, 4, 16, 16
    planes = 8
    Cout = planes * 4  # Bottleneck.outchannel_ratio = 4

    key = jax.random.PRNGKey(0)
    ks = jax.random.split(key, 12)

    # Deterministic synthetic parameters (shapes from the module's __init__).
    g1 = 1.0 + 0.1 * jax.random.normal(ks[0], (Cin,), jnp.float32)
    b1 = 0.1 * jax.random.normal(ks[1], (Cin,), jnp.float32)
    w1 = 0.2 * jax.random.normal(ks[2], (Cin, planes), jnp.float32)          # 1x1
    g2 = 1.0 + 0.1 * jax.random.normal(ks[3], (planes,), jnp.float32)
    b2 = 0.1 * jax.random.normal(ks[4], (planes,), jnp.float32)
    w2 = 0.2 * jax.random.normal(ks[5], (3, 3, planes, planes), jnp.float32)  # 3x3 HWIO
    g3 = 1.0 + 0.1 * jax.random.normal(ks[6], (planes,), jnp.float32)
    b3 = 0.1 * jax.random.normal(ks[7], (planes,), jnp.float32)
    w3 = 0.2 * jax.random.normal(ks[8], (planes, Cout), jnp.float32)          # 1x1
    g4 = 1.0 + 0.1 * jax.random.normal(ks[9], (Cout,), jnp.float32)
    b4 = 0.1 * jax.random.normal(ks[10], (Cout,), jnp.float32)
    params = (g1, b1, w1, g2, b2, w2, g3, b3, w3, g4, b4)

    x_nchw = jax.random.normal(ks[11], (N, Cin, H, W), jnp.float32)  # PyTorch layout

    out_nchw = jax.block_until_ready(bottleneck_pallas(x_nchw, params))

    x_nhwc = jnp.transpose(x_nchw, (0, 2, 3, 1))
    ref_nchw = jnp.transpose(
        jax.block_until_ready(bottleneck_ref(x_nhwc, params)), (0, 3, 1, 2))

    assert out_nchw.shape == (N, Cout, H, W), out_nchw.shape
    assert bool(jnp.all(jnp.isfinite(out_nchw)))
    max_err = float(jnp.max(jnp.abs(out_nchw - ref_nchw)))
    assert bool(jnp.allclose(out_nchw, ref_nchw, rtol=5e-3, atol=5e-3)), max_err

    print("KERNEL_OK")
</pallas_src>

<mosaic_0001>
module attributes {stable_mosaic.version = 11 : i64} {
  func.func @bottleneck_kernel(%arg0: memref<4x512xf32, #tpu.memory_space<vmem>>, %arg1: memref<4x1xf32, #tpu.memory_space<vmem>>, %arg2: memref<4x1xf32, #tpu.memory_space<vmem>>, %arg3: memref<8x4xf32, #tpu.memory_space<vmem>>, %arg4: memref<8x1xf32, #tpu.memory_space<vmem>>, %arg5: memref<8x1xf32, #tpu.memory_space<vmem>>, %arg6: memref<8x72xf32, #tpu.memory_space<vmem>>, %arg7: memref<9x512xf32, #tpu.memory_space<vmem>>, %arg8: memref<8x1xf32, #tpu.memory_space<vmem>>, %arg9: memref<8x1xf32, #tpu.memory_space<vmem>>, %arg10: memref<32x8xf32, #tpu.memory_space<vmem>>, %arg11: memref<32x1xf32, #tpu.memory_space<vmem>>, %arg12: memref<32x1xf32, #tpu.memory_space<vmem>>, %arg13: memref<32x512xf32, #tpu.memory_space<vmem>>) attributes {dimension_semantics = [], scalar_prefetch = 0 : i64, scratch_operands = 0 : i64, tpu.core_type = #tpu.core_type<tc>} {
    %c0 = arith.constant 0 : index
    %c0_0 = arith.constant 0 : index
    %0 = vector.load %arg0[%c0, %c0_0] : memref<4x512xf32, #tpu.memory_space<vmem>>, vector<4x512xf32>
    %c0_1 = arith.constant 0 : index
    %c0_2 = arith.constant 0 : index
    %1 = vector.load %arg1[%c0_1, %c0_2] : memref<4x1xf32, #tpu.memory_space<vmem>>, vector<4x1xf32>
    %c0_3 = arith.constant 0 : index
    %c0_4 = arith.constant 0 : index
    %2 = vector.load %arg2[%c0_3, %c0_4] : memref<4x1xf32, #tpu.memory_space<vmem>>, vector<4x1xf32>
    %cst = arith.constant dense<0.000000e+00> : vector<4xf32>
    %3 = vector.multi_reduction <add>, %0, %cst [1] : vector<4x512xf32> to vector<4xf32>
    %4 = vector.shape_cast %3 : vector<4xf32> to vector<4x1xf32>
    %cst_5 = arith.constant 5.120000e+02 : f32
    %5 = vector.broadcast %cst_5 : f32 to vector<4x1xf32>
    %6 = arith.divf %4, %5 : vector<4x1xf32>
    %7 = arith.mulf %0, %0 : vector<4x512xf32>
    %cst_6 = arith.constant dense<0.000000e+00> : vector<4xf32>
    %8 = vector.multi_reduction <add>, %7, %cst_6 [1] : vector<4x512xf32> to vector<4xf32>
    %9 = vector.shape_cast %8 : vector<4xf32> to vector<4x1xf32>
    %cst_7 = arith.constant 5.120000e+02 : f32
    %10 = vector.broadcast %cst_7 : f32 to vector<4x1xf32>
    %11 = arith.divf %9, %10 : vector<4x1xf32>
    %12 = arith.mulf %6, %6 : vector<4x1xf32>
    %13 = arith.subf %11, %12 : vector<4x1xf32>
    %cst_8 = arith.constant 9.99999974E-6 : f32
    %14 = vector.broadcast %cst_8 : f32 to vector<4x1xf32>
    %15 = arith.addf %13, %14 : vector<4x1xf32>
    %16 = math.rsqrt %15 : vector<4x1xf32>
    %17 = arith.mulf %1, %16 : vector<4x1xf32>
    %18 = arith.mulf %6, %17 : vector<4x1xf32>
    %19 = arith.subf %2, %18 : vector<4x1xf32>
    %20 = vector.broadcast %17 : vector<4x1xf32> to vector<4x512xf32>
    %21 = arith.mulf %0, %20 : vector<4x512xf32>
    %22 = vector.broadcast %19 : vector<4x1xf32> to vector<4x512xf32>
    %23 = arith.addf %21, %22 : vector<4x512xf32>
    %c0_9 = arith.constant 0 : index
    %c0_10 = arith.constant 0 : index
    %24 = vector.load %arg3[%c0_9, %c0_10] : memref<8x4xf32, #tpu.memory_space<vmem>>, vector<8x4xf32>
    %cst_11 = arith.constant dense<0.000000e+00> : vector<8x512xf32>
    %25 = tpu.matmul %24, %23, %cst_11 {dimension_numbers = #tpu.dot_dimension_numbers<[1], [0], [0], [1], [0, 0, 1, 1], [], []>} : vector<8x4xf32>, vector<4x512xf32>, vector<8x512xf32> -> vector<8x512xf32>
    %c0_12 = arith.constant 0 : index
    %c0_13 = arith.constant 0 : index
    %26 = vector.load %arg4[%c0_12, %c0_13] : memref<8x1xf32, #tpu.memory_space<vmem>>, vector<8x1xf32>
    %c0_14 = arith.constant 0 : index
    %c0_15 = arith.constant 0 : index
    %27 = vector.load %arg5[%c0_14, %c0_15] : memref<8x1xf32, #tpu.memory_space<vmem>>, vector<8x1xf32>
    %cst_16 = arith.constant dense<0.000000e+00> : vector<8xf32>
    %28 = vector.multi_reduction <add>, %25, %cst_16 [1] : vector<8x512xf32> to vector<8xf32>
    %29 = vector.shape_cast %28 : vector<8xf32> to vector<8x1xf32>
    %cst_17 = arith.constant 5.120000e+02 : f32
    %30 = vector.broadcast %cst_17 : f32 to vector<8x1xf32>
    %31 = arith.divf %29, %30 : vector<8x1xf32>
    %32 = arith.mulf %25, %25 : vector<8x512xf32>
    %cst_18 = arith.constant dense<0.000000e+00> : vector<8xf32>
    %33 = vector.multi_reduction <add>, %32, %cst_18 [1] : vector<8x512xf32> to vector<8xf32>
    %34 = vector.shape_cast %33 : vector<8xf32> to vector<8x1xf32>
    %cst_19 = arith.constant 5.120000e+02 : f32
    %35 = vector.broadcast %cst_19 : f32 to vector<8x1xf32>
    %36 = arith.divf %34, %35 : vector<8x1xf32>
    %37 = arith.mulf %31, %31 : vector<8x1xf32>
    %38 = arith.subf %36, %37 : vector<8x1xf32>
    %cst_20 = arith.constant 9.99999974E-6 : f32
    %39 = vector.broadcast %cst_20 : f32 to vector<8x1xf32>
    %40 = arith.addf %38, %39 : vector<8x1xf32>
    %41 = math.rsqrt %40 : vector<8x1xf32>
    %42 = arith.mulf %26, %41 : vector<8x1xf32>
    %43 = arith.mulf %31, %42 : vector<8x1xf32>
    %44 = arith.subf %27, %43 : vector<8x1xf32>
    %45 = vector.broadcast %42 : vector<8x1xf32> to vector<8x512xf32>
    %46 = arith.mulf %25, %45 : vector<8x512xf32>
    %47 = vector.broadcast %44 : vector<8x1xf32> to vector<8x512xf32>
    %48 = arith.addf %46, %47 : vector<8x512xf32>
    %cst_21 = arith.constant 0.000000e+00 : f32
    %49 = vector.broadcast %cst_21 : f32 to vector<8x512xf32>
    %50 = arith.maximumf %48, %49 : vector<8x512xf32>
    %51 = vector.extract_strided_slice %50 {offsets = [0, 495], sizes = [8, 17], strides = [1, 1]} : vector<8x512xf32> to vector<8x17xf32>
    %52 = vector.extract_strided_slice %50 {offsets = [0, 0], sizes = [8, 495], strides = [1, 1]} : vector<8x512xf32> to vector<8x495xf32>
    %53 = tpu.concatenate %51, %52 in 1 : vector<8x17xf32>, vector<8x495xf32> -> vector<8x512xf32>
    %c0_22 = arith.constant 0 : index
    %c0_23 = arith.constant 0 : index
    %54 = vector.load %arg7[%c0_22, %c0_23] : memref<9x512xf32, #tpu.memory_space<vmem>>, vector<1x512xf32>
    %55 = vector.broadcast %54 : vector<1x512xf32> to vector<8x512xf32>
    %56 = arith.mulf %53, %55 : vector<8x512xf32>
    %57 = vector.extract_strided_slice %50 {offsets = [0, 496], sizes = [8, 16], strides = [1, 1]} : vector<8x512xf32> to vector<8x16xf32>
    %58 = vector.extract_strided_slice %50 {offsets = [0, 0], sizes = [8, 496], strides = [1, 1]} : vector<8x512xf32> to vector<8x496xf32>
    %59 = tpu.concatenate %57, %58 in 1 : vector<8x16xf32>, vector<8x496xf32> -> vector<8x512xf32>
    %c1 = arith.constant 1 : index
    %c0_24 = arith.constant 0 : index
    %60 = vector.load %arg7[%c1, %c0_24] : memref<9x512xf32, #tpu.memory_space<vmem>>, vector<1x512xf32>
    %61 = vector.broadcast %60 : vector<1x512xf32> to vector<8x512xf32>
    %62 = arith.mulf %59, %61 : vector<8x512xf32>
    %63 = vector.extract_strided_slice %50 {offsets = [0, 497], sizes = [8, 15], strides = [1, 1]} : vector<8x512xf32> to vector<8x15xf32>
    %64 = vector.extract_strided_slice %50 {offsets = [0, 0], sizes = [8, 497], strides = [1, 1]} : vector<8x512xf32> to vector<8x497xf32>
    %65 = tpu.concatenate %63, %64 in 1 : vector<8x15xf32>, vector<8x497xf32> -> vector<8x512xf32>
    %c2 = arith.constant 2 : index
    %c0_25 = arith.constant 0 : index
    %66 = vector.load %arg7[%c2, %c0_25] : memref<9x512xf32, #tpu.memory_space<vmem>>, vector<1x512xf32>
    %67 = vector.broadcast %66 : vector<1x512xf32> to vector<8x512xf32>
    %68 = arith.mulf %65, %67 : vector<8x512xf32>
    %69 = vector.extract_strided_slice %50 {offsets = [0, 511], sizes = [8, 1], strides = [1, 1]} : vector<8x512xf32> to vector<8x1xf32>
    %70 = vector.extract_strided_slice %50 {offsets = [0, 0], sizes = [8, 511], strides = [1, 1]} : vector<8x512xf32> to vector<8x511xf32>
    %71 = tpu.concatenate %69, %70 in 1 : vector<8x1xf32>, vector<8x511xf32> -> vector<8x512xf32>
    %c3 = arith.constant 3 : index
    %c0_26 = arith.constant 0 : index
    %72 = vector.load %arg7[%c3, %c0_26] : memref<9x512xf32, #tpu.memory_space<vmem>>, vector<1x512xf32>
    %73 = vector.broadcast %72 : vector<1x512xf32> to vector<8x512xf32>
    %74 = arith.mulf %71, %73 : vector<8x512xf32>
    %c4 = arith.constant 4 : index
    %c0_27 = arith.constant 0 : index
    %75 = vector.load %arg7[%c4, %c0_27] : memref<9x512xf32, #tpu.memory_space<vmem>>, vector<1x512xf32>
    %76 = vector.broadcast %75 : vector<1x512xf32> to vector<8x512xf32>
    %77 = arith.mulf %50, %76 : vector<8x512xf32>
    %78 = vector.extract_strided_slice %50 {offsets = [0, 1], sizes = [8, 511], strides = [1, 1]} : vector<8x512xf32> to vector<8x511xf32>
    %79 = vector.extract_strided_slice %50 {offsets = [0, 0], sizes = [8, 1], strides = [1, 1]} : vector<8x512xf32> to vector<8x1xf32>
    %80 = tpu.concatenate %78, %79 in 1 : vector<8x511xf32>, vector<8x1xf32> -> vector<8x512xf32>
    %c5 = arith.constant 5 : index
    %c0_28 = arith.constant 0 : index
    %81 = vector.load %arg7[%c5, %c0_28] : memref<9x512xf32, #tpu.memory_space<vmem>>, vector<1x512xf32>
    %82 = vector.broadcast %81 : vector<1x512xf32> to vector<8x512xf32>
    %83 = arith.mulf %80, %82 : vector<8x512xf32>
    %84 = vector.extract_strided_slice %50 {offsets = [0, 15], sizes = [8, 497], strides = [1, 1]} : vector<8x512xf32> to vector<8x497xf32>
    %85 = vector.extract_strided_slice %50 {offsets = [0, 0], sizes = [8, 15], strides = [1, 1]} : vector<8x512xf32> to vector<8x15xf32>
    %86 = tpu.concatenate %84, %85 in 1 : vector<8x497xf32>, vector<8x15xf32> -> vector<8x512xf32>
    %c6 = arith.constant 6 : index
    %c0_29 = arith.constant 0 : index
    %87 = vector.load %arg7[%c6, %c0_29] : memref<9x512xf32, #tpu.memory_space<vmem>>, vector<1x512xf32>
    %88 = vector.broadcast %87 : vector<1x512xf32> to vector<8x512xf32>
    %89 = arith.mulf %86, %88 : vector<8x512xf32>
    %90 = vector.extract_strided_slice %50 {offsets = [0, 16], sizes = [8, 496], strides = [1, 1]} : vector<8x512xf32> to vector<8x496xf32>
    %91 = vector.extract_strided_slice %50 {offsets = [0, 0], sizes = [8, 16], strides = [1, 1]} : vector<8x512xf32> to vector<8x16xf32>
    %92 = tpu.concatenate %90, %91 in 1 : vector<8x496xf32>, vector<8x16xf32> -> vector<8x512xf32>
    %c7 = arith.constant 7 : index
    %c0_30 = arith.constant 0 : index
    %93 = vector.load %arg7[%c7, %c0_30] : memref<9x512xf32, #tpu.memory_space<vmem>>, vector<1x512xf32>
    %94 = vector.broadcast %93 : vector<1x512xf32> to vector<8x512xf32>
    %95 = arith.mulf %92, %94 : vector<8x512xf32>
    %96 = vector.extract_strided_slice %50 {offsets = [0, 17], sizes = [8, 495], strides = [1, 1]} : vector<8x512xf32> to vector<8x495xf32>
    %97 = vector.extract_strided_slice %50 {offsets = [0, 0], sizes = [8, 17], strides = [1, 1]} : vector<8x512xf32> to vector<8x17xf32>
    %98 = tpu.concatenate %96, %97 in 1 : vector<8x495xf32>, vector<8x17xf32> -> vector<8x512xf32>
    %c8 = arith.constant 8 : index
    %c0_31 = arith.constant 0 : index
    %99 = vector.load %arg7[%c8, %c0_31] : memref<9x512xf32, #tpu.memory_space<vmem>>, vector<1x512xf32>
    %100 = vector.broadcast %99 : vector<1x512xf32> to vector<8x512xf32>
    %101 = arith.mulf %98, %100 : vector<8x512xf32>
    %102 = tpu.concatenate %56, %62, %68, %74, %77, %83, %89, %95, %101 in 0 : vector<8x512xf32>, vector<8x512xf32>, vector<8x512xf32>, vector<8x512xf32>, vector<8x512xf32>, vector<8x512xf32>, vector<8x512xf32>, vector<8x512xf32>, vector<8x512xf32> -> vector<72x512xf32>
    %c0_32 = arith.constant 0 : index
    %c0_33 = arith.constant 0 : index
    %103 = vector.load %arg6[%c0_32, %c0_33] : memref<8x72xf32, #tpu.memory_space<vmem>>, vector<8x72xf32>
    %cst_34 = arith.constant dense<0.000000e+00> : vector<8x512xf32>
    %104 = tpu.matmul %103, %102, %cst_34 {dimension_numbers = #tpu.dot_dimension_numbers<[1], [0], [0], [1], [0, 0, 1, 1], [], []>} : vector<8x72xf32>, vector<72x512xf32>, vector<8x512xf32> -> vector<8x512xf32>
    %c0_35 = arith.constant 0 : index
    %c0_36 = arith.constant 0 : index
    %105 = vector.load %arg8[%c0_35, %c0_36] : memref<8x1xf32, #tpu.memory_space<vmem>>, vector<8x1xf32>
    %c0_37 = arith.constant 0 : index
    %c0_38 = arith.constant 0 : index
    %106 = vector.load %arg9[%c0_37, %c0_38] : memref<8x1xf32, #tpu.memory_space<vmem>>, vector<8x1xf32>
    %cst_39 = arith.constant dense<0.000000e+00> : vector<8xf32>
    %107 = vector.multi_reduction <add>, %104, %cst_39 [1] : vector<8x512xf32> to vector<8xf32>
    %108 = vector.shape_cast %107 : vector<8xf32> to vector<8x1xf32>
    %cst_40 = arith.constant 5.120000e+02 : f32
    %109 = vector.broadcast %cst_40 : f32 to vector<8x1xf32>
    %110 = arith.divf %108, %109 : vector<8x1xf32>
    %111 = arith.mulf %104, %104 : vector<8x512xf32>
    %cst_41 = arith.constant dense<0.000000e+00> : vector<8xf32>
    %112 = vector.multi_reduction <add>, %111, %cst_41 [1] : vector<8x512xf32> to vector<8xf32>
    %113 = vector.shape_cast %112 : vector<8xf32> to vector<8x1xf32>
    %cst_42 = arith.constant 5.120000e+02 : f32
    %114 = vector.broadcast %cst_42 : f32 to vector<8x1xf32>
    %115 = arith.divf %113, %114 : vector<8x1xf32>
    %116 = arith.mulf %110, %110 : vector<8x1xf32>
    %117 = arith.subf %115, %116 : vector<8x1xf32>
    %cst_43 = arith.constant 9.99999974E-6 : f32
    %118 = vector.broadcast %cst_43 : f32 to vector<8x1xf32>
    %119 = arith.addf %117, %118 : vector<8x1xf32>
    %120 = math.rsqrt %119 : vector<8x1xf32>
    %121 = arith.mulf %105, %120 : vector<8x1xf32>
    %122 = arith.mulf %110, %121 : vector<8x1xf32>
    %123 = arith.subf %106, %122 : vector<8x1xf32>
    %124 = vector.broadcast %121 : vector<8x1xf32> to vector<8x512xf32>
    %125 = arith.mulf %104, %124 : vector<8x512xf32>
    %126 = vector.broadcast %123 : vector<8x1xf32> to vector<8x512xf32>
    %127 = arith.addf %125, %126 : vector<8x512xf32>
    %cst_44 = arith.constant 0.000000e+00 : f32
    %128 = vector.broadcast %cst_44 : f32 to vector<8x512xf32>
    %129 = arith.maximumf %127, %128 : vector<8x512xf32>
    %c0_45 = arith.constant 0 : index
    %c0_46 = arith.constant 0 : index
    %130 = vector.load %arg10[%c0_45, %c0_46] : memref<32x8xf32, #tpu.memory_space<vmem>>, vector<32x8xf32>
    %cst_47 = arith.constant dense<0.000000e+00> : vector<32x512xf32>
    %131 = tpu.matmul %130, %129, %cst_47 {dimension_numbers = #tpu.dot_dimension_numbers<[1], [0], [0], [1], [0, 0, 1, 1], [], []>} : vector<32x8xf32>, vector<8x512xf32>, vector<32x512xf32> -> vector<32x512xf32>
    %c0_48 = arith.constant 0 : index
    %c0_49 = arith.constant 0 : index
    %132 = vector.load %arg11[%c0_48, %c0_49] : memref<32x1xf32, #tpu.memory_space<vmem>>, vector<32x1xf32>
    %c0_50 = arith.constant 0 : index
    %c0_51 = arith.constant 0 : index
    %133 = vector.load %arg12[%c0_50, %c0_51] : memref<32x1xf32, #tpu.memory_space<vmem>>, vector<32x1xf32>
    %cst_52 = arith.constant dense<0.000000e+00> : vector<32xf32>
    %134 = vector.multi_reduction <add>, %131, %cst_52 [1] : vector<32x512xf32> to vector<32xf32>
    %135 = vector.shape_cast %134 : vector<32xf32> to vector<32x1xf32>
    %cst_53 = arith.constant 5.120000e+02 : f32
    %136 = vector.broadcast %cst_53 : f32 to vector<32x1xf32>
    %137 = arith.divf %135, %136 : vector<32x1xf32>
    %138 = arith.mulf %131, %131 : vector<32x512xf32>
    %cst_54 = arith.constant dense<0.000000e+00> : vector<32xf32>
    %139 = vector.multi_reduction <add>, %138, %cst_54 [1] : vector<32x512xf32> to vector<32xf32>
    %140 = vector.shape_cast %139 : vector<32xf32> to vector<32x1xf32>
    %cst_55 = arith.constant 5.120000e+02 : f32
    %141 = vector.broadcast %cst_55 : f32 to vector<32x1xf32>
    %142 = arith.divf %140, %141 : vector<32x1xf32>
    %143 = arith.mulf %137, %137 : vector<32x1xf32>
    %144 = arith.subf %142, %143 : vector<32x1xf32>
    %cst_56 = arith.constant 9.99999974E-6 : f32
    %145 = vector.broadcast %cst_56 : f32 to vector<32x1xf32>
    %146 = arith.addf %144, %145 : vector<32x1xf32>
    %147 = math.rsqrt %146 : vector<32x1xf32>
    %148 = arith.mulf %132, %147 : vector<32x1xf32>
    %149 = arith.mulf %137, %148 : vector<32x1xf32>
    %150 = arith.subf %133, %149 : vector<32x1xf32>
    %151 = vector.broadcast %148 : vector<32x1xf32> to vector<32x512xf32>
    %152 = arith.mulf %131, %151 : vector<32x512xf32>
    %153 = vector.broadcast %150 : vector<32x1xf32> to vector<32x512xf32>
    %154 = arith.addf %152, %153 : vector<32x512xf32>
    %c0_57 = arith.constant 0 : index
    %c0_58 = arith.constant 0 : index
    %155 = vector.load %arg13[%c0_57, %c0_58] : memref<32x512xf32, #tpu.memory_space<vmem>>, vector<32x512xf32>
    tpu.vector_store %arg13[%c0_57, %c0_58], %154 {strides = array<i32>} : memref<32x512xf32, #tpu.memory_space<vmem>>, vector<32x512xf32>,
    %156 = vector.extract_strided_slice %154 {offsets = [0, 0], sizes = [4, 512], strides = [1, 1]} : vector<32x512xf32> to vector<4x512xf32>
    %157 = arith.addf %156, %0 : vector<4x512xf32>
    %c0_59 = arith.constant 0 : index
    %c0_60 = arith.constant 0 : index
    %158 = vector.load %arg13[%c0_59, %c0_60] : memref<32x512xf32, #tpu.memory_space<vmem>>, vector<4x512xf32>
    tpu.vector_store %arg13[%c0_59, %c0_60], %157 {strides = array<i32>} : memref<32x512xf32, #tpu.memory_space<vmem>>, vector<4x512xf32>,
    return
  }
}

</mosaic_0001>

<llo_original>
// kernel: tpu_custom_call.1
$region0: #{tpu_custom_call.1}
  #allocation0 [shape = 'u32[]', space=smem, size = 0x4, offset = 0x4, fixed_abs, tag = 'smem constant byte address 0x4 - core index']
  #allocation1 [shape = 'u32[144,128]{1,0:T(1,128)}', space=vmem, size = 0x12000, scoped, tag = 'internal scratch']
  %s0 = inlined_call_operand.vmem [shape: f32[4,512], index: 0, kind: input, shape index: {}]
  %s1 = inlined_call_operand.vmem [shape: f32[4,1], index: 1, kind: input, shape index: {}]
  %s2 = inlined_call_operand.vmem [shape: f32[4,1], index: 2, kind: input, shape index: {}]
  %s3 = inlined_call_operand.vmem [shape: f32[8,4], index: 3, kind: input, shape index: {}]
  %s4 = inlined_call_operand.vmem [shape: f32[8,1], index: 4, kind: input, shape index: {}]
  %s5 = inlined_call_operand.vmem [shape: f32[8,1], index: 5, kind: input, shape index: {}]
  %s6 = inlined_call_operand.vmem [shape: f32[8,72], index: 6, kind: input, shape index: {}]
  %s7 = inlined_call_operand.vmem [shape: f32[9,512], index: 7, kind: input, shape index: {}]
  %s8 = inlined_call_operand.vmem [shape: f32[8,1], index: 8, kind: input, shape index: {}]
  %s9 = inlined_call_operand.vmem [shape: f32[8,1], index: 9, kind: input, shape index: {}]
  %s10 = inlined_call_operand.vmem [shape: f32[32,8], index: 10, kind: input, shape index: {}]
  %s11 = inlined_call_operand.vmem [shape: f32[32,1], index: 11, kind: input, shape index: {}]
  %s12 = inlined_call_operand.vmem [shape: f32[32,1], index: 12, kind: input, shape index: {}]
  %s13 = inlined_call_operand.hbm [shape: f32[32,512], index: 13, kind: output, shape index: {}]
  %s14 = sld [smem:[#allocation0]]
  $region62: #{tpu_custom_call.1} parent=0
    _
  %s16 = ssub.s32 1, %s14
  %s17 = scalar_select 0, %s16, %s14
  $region1: #{tpu_custom_call.1} parent=0
    #allocation2 [shape = 'u8[65536]{0}', space=vmem, size = 0x10000, scoped, tag = 'output window, operand 0, single buffered']
    #allocation3 [shape = 's32[1]{0}', space=sflag, size = 0x4, scoped, tag = 'scoped memory for tpu_custom_call.1']
    %18 = vsyncpa [#allocation3], 0
    // Predicated region
    $region2: #{tpu_custom_call.1} parent=1 // pred_check
      _
    $region3: #{tpu_custom_call.1} parent=1 // pred_check_branch
      %20 = sbr.rel (0) target = $region5
    $region4: #{tpu_custom_call.1} parent=1 // pred_region
      _
    $region5: #{tpu_custom_call.1} parent=1 // pred_fallthru
      _
    // Predicated region
    $region6: #{tpu_custom_call.1} parent=1 // pred_check
      _
    $region7: #{tpu_custom_call.1} parent=1 // pred_check_branch
      %22 = sbr.rel (0) target = $region9
    $region8: #{tpu_custom_call.1} parent=1 // pred_region
      _
    $region9: #{tpu_custom_call.1} parent=1 // pred_fallthru
      _
    // Predicated region
    $region10: #{tpu_custom_call.1} parent=1 // pred_check
      _
    $region11: #{tpu_custom_call.1} parent=1 // pred_check_branch
      %24 = sbr.rel (0) target = $region13
    $region12: #{tpu_custom_call.1} parent=1 // pred_region
      _
    $region13: #{tpu_custom_call.1} parent=1 // pred_fallthru
      _
    // Predicated region
    $region14: #{tpu_custom_call.1} parent=1 // pred_check
      _
    $region15: #{tpu_custom_call.1} parent=1 // pred_check_branch
      %26 = sbr.rel (0) target = $region17
    $region16: #{tpu_custom_call.1} parent=1 // pred_region
      _
    $region17: #{tpu_custom_call.1} parent=1 // pred_fallthru
      _
    // Predicated region
    $region18: #{tpu_custom_call.1} parent=1 // pred_check
      _
    $region19: #{tpu_custom_call.1} parent=1 // pred_check_branch
      %28 = sbr.rel (0) target = $region21
    $region20: #{tpu_custom_call.1} parent=1 // pred_region
      _
    $region21: #{tpu_custom_call.1} parent=1 // pred_fallthru
      _
    // Predicated region
    $region22: #{tpu_custom_call.1} parent=1 // pred_check
      _
    $region23: #{tpu_custom_call.1} parent=1 // pred_check_branch
      %30 = sbr.rel (0) target = $region25
    $region24: #{tpu_custom_call.1} parent=1 // pred_region
      _
    $region25: #{tpu_custom_call.1} parent=1 // pred_fallthru
      _
    // Predicated region
    $region26: #{tpu_custom_call.1} parent=1 // pred_check
      _
    $region27: #{tpu_custom_call.1} parent=1 // pred_check_branch
      %32 = sbr.rel (0) target = $region29
    $region28: #{tpu_custom_call.1} parent=1 // pred_region
      _
    $region29: #{tpu_custom_call.1} parent=1 // pred_fallthru
      _
    // Predicated region
    $region30: #{tpu_custom_call.1} parent=1 // pred_check
      _
    $region31: #{tpu_custom_call.1} parent=1 // pred_check_branch
      %34 = sbr.rel (0) target = $region33
    $region32: #{tpu_custom_call.1} parent=1 // pred_region
      _
    $region33: #{tpu_custom_call.1} parent=1 // pred_fallthru
      _
    // Predicated region
    $region34: #{tpu_custom_call.1} parent=1 // pred_check
      _
    $region35: #{tpu_custom_call.1} parent=1 // pred_check_branch
      %36 = sbr.rel (0) target = $region37
    $region36: #{tpu_custom_call.1} parent=1 // pred_region
      _
    $region37: #{tpu_custom_call.1} parent=1 // pred_fallthru
      _
    // Predicated region
    $region38: #{tpu_custom_call.1} parent=1 // pred_check
      _
    $region39: #{tpu_custom_call.1} parent=1 // pred_check_branch
      %38 = sbr.rel (0) target = $region41
    $region40: #{tpu_custom_call.1} parent=1 // pred_region
      _
    $region41: #{tpu_custom_call.1} parent=1 // pred_fallthru
      _
    // Predicated region
    $region42: #{tpu_custom_call.1} parent=1 // pred_check
      _
    $region43: #{tpu_custom_call.1} parent=1 // pred_check_branch
      %40 = sbr.rel (0) target = $region45
    $region44: #{tpu_custom_call.1} parent=1 // pred_region
      _
    $region45: #{tpu_custom_call.1} parent=1 // pred_fallthru
      _
    // Predicated region
    $region46: #{tpu_custom_call.1} parent=1 // pred_check
      _
    $region47: #{tpu_custom_call.1} parent=1 // pred_check_branch
      %42 = sbr.rel (0) target = $region49
    $region48: #{tpu_custom_call.1} parent=1 // pred_region
      _
    $region49: #{tpu_custom_call.1} parent=1 // pred_fallthru
      _
    // Predicated region
    $region50: #{tpu_custom_call.1} parent=1 // pred_check
      _
    $region51: #{tpu_custom_call.1} parent=1 // pred_check_branch
      %44 = sbr.rel (0) target = $region53
    $region52: #{tpu_custom_call.1} parent=1 // pred_region
      _
    $region53: #{tpu_custom_call.1} parent=1 // pred_fallthru
      _
    %v45 = vld [vmem:[%s0] sm:$0xff]
    %v46 = vld [vmem:[%s0 + $0x8] sm:$0xff]
    %v47 = vld [vmem:[%s1] sm:$0xf]
    %v48 = vld [vmem:[%s2] sm:$0xf]
    %v51 = vcombine.high %v45, %v45
    %v52 = vcombine.high %v46, %v46
    %vm55 = vcmask 1043456
    %v56 = vsel %vm55, %v45, 0.0
    %v57 = vsel %vm55, %v51, 0.0
    %v58 = vadd.f32 %v56, %v57
    %v59 = vsel %vm55, %v46, 0.0
    %v60 = vadd.f32 %v58, %v59
    %v61 = vsel %vm55, %v52, 0.0
    %v62 = vadd.f32 %v60, %v61
    %63 = vadd.xlane.f32.xlu0 %v62
    %v64 = vpop.xlane.xlu0 %63
    %v65 = vrcp.pop 512.0
    %v66 = vmul.f32 %v64, %v65
    %v67 = vmul.f32 %v45, %v45
    %v68 = vmul.f32 %v46, %v46
    %v71 = vcombine.high %v67, %v67
    %v72 = vcombine.high %v68, %v68
    %v75 = vsel %vm55, %v67, 0.0
    %v76 = vsel %vm55, %v71, 0.0
    %v77 = vadd.f32 %v75, %v76
    %v78 = vsel %vm55, %v68, 0.0
    %v79 = vadd.f32 %v77, %v78
    %v80 = vsel %vm55, %v72, 0.0
    %v81 = vadd.f32 %v79, %v80
    %82 = vadd.xlane.f32.xlu0 %v81
    %v83 = vpop.xlane.xlu0 %82
    %v84 = vmul.f32 %v83, %v65
    %v85 = vmul.f32 %v66, %v66
    %v86 = vsub.f32 %v84, %v85
    %v87 = vadd.f32 %v86, 1e-05
    %v88 = vrsqrt.pop %v87
    %v89 = vmul.f32 %v47, %v88
    %v90 = vmul.f32 %v66, %v89
    %v91 = vsub.f32 %v48, %v90
    %93 = vset.pattern.permute.xlu0 0
    %94 = vperm.xlu0 %93, %v89
    %v95 = vpop.permute.xlu0 %94
    %v97 = vunpack.c.l.s4 839922192
    %v98 = vunpack.c.0.s8 %v97
    %v99 = vlaneseq
    %v100 = vshrl.u32 %v99, 7
    %v101 = vsub.s32 %v98, %v100
    %v102 = vrot.slane %v95, %v101
    %v104 = vmul.f32 %v45, %v102
    %v105 = vmul.f32 %v46, %v102
    %107 = vset.pattern.permute.xlu0 0
    %108 = vperm.xlu0 %107, %v91
    %v109 = vpop.permute.xlu0 %108
    %v111 = vunpack.c.l.s4 839922192
    %v112 = vunpack.c.0.s8 %v111
    %v113 = vlaneseq
    %v114 = vshrl.u32 %v113, 7
    %v115 = vsub.s32 %v112, %v114
    %v116 = vrot.slane %v109, %v115
    %v118 = vadd.f32 %v104, %v116
    %v119 = vadd.f32 %v105, %v116
    %v120 = vld [vmem:[%s3] sm:$0xff]
    %v123 = vcombine.high %v118, %v118
    %v124 = vcombine.high %v119, %v119
    %vm125 = vcmask 31744
    %v127 = vsel %vm125, %v120, 0
    %v129 = vsel %vm55, %v118, 0
    %v131 = vsel %vm55, %v123, 0
    %v133 = vsel %vm55, %v119, 0
    %v135 = vsel %vm55, %v124, 0
    %137 = vmatprep.subr.mxu0 %v131
    %138 = vmatpush1.msra.mxu0 %v129
    %139 = vmatprep.subr.mxu0 0.0
    %140 = vmatpush1.msra.mxu0 0.0
    %141 = vmatprep.subr.mxu0 0.0
    %142 = vmatpush1.msra.mxu0 0.0
    %143 = vmatprep.subr.mxu0 0.0
    %144 = vmatpush1.msra.mxu0 0.0
    %145 = vmatprep.subr.mxu0 0.0
    %146 = vmatpush1.msra.mxu0 0.0
    %147 = vmatprep.subr.mxu0 0.0
    %148 = vmatpush1.msra.mxu0 0.0
    %149 = vmatprep.subr.mxu0 0.0
    %150 = vmatpush1.msra.mxu0 0.0
    %151 = vmatprep.subr.mxu0 0.0
    %152 = vmatpush1.msra.mxu0 0.0
    %153 = vmatprep.subr.mxu0 0.0
    %154 = vmatpush1.msra.mxu0 0.0
    %155 = vmatprep.subr.mxu0 0.0
    %156 = vmatpush1.msra.mxu0 0.0
    %157 = vmatprep.subr.mxu0 0.0
    %158 = vmatpush1.msra.mxu0 0.0
    %159 = vmatprep.subr.mxu0 0.0
    %160 = vmatpush1.msra.mxu0 0.0
    %161 = vmatprep.subr.mxu0 0.0
    %162 = vmatpush1.msra.mxu0 0.0
    %163 = vmatprep.subr.mxu0 0.0
    %164 = vmatpush1.msra.mxu0 0.0
    %165 = vmatprep.subr.mxu0 0.0
    %166 = vmatpush1.msra.mxu0 0.0
    %167 = vmatprep.subr.mxu0 0.0
    %168 = vmatpush1.msra.mxu0 0.0
    %169 = vmatprep.subr.mxu0 0.0
    %170 = vmatpush1.msra.mxu0 0.0
    %171 = vmatprep.subr.mxu0 0.0
    %172 = vmatpush1.msra.mxu0 0.0
    %173 = vmatprep.subr.mxu0 0.0
    %174 = vmatpush1.msra.mxu0 0.0
    %175 = vmatprep.subr.mxu0 0.0
    %176 = vmatpush1.msra.mxu0 0.0
    %177 = vmatprep.subr.mxu0 0.0
    %178 = vmatpush1.msra.mxu0 0.0
    %179 = vmatprep.subr.mxu0 0.0
    %180 = vmatpush1.msra.mxu0 0.0
    %181 = vmatprep.subr.mxu0 0.0
    %182 = vmatpush1.msra.mxu0 0.0
    %183 = vmatprep.subr.mxu0 0.0
    %184 = vmatpush1.msra.mxu0 0.0
    %185 = vmatprep.subr.mxu0 0.0
    %186 = vmatpush1.msra.mxu0 0.0
    %187 = vmatprep.subr.mxu0 0.0
    %188 = vmatpush1.msra.mxu0 0.0
    %189 = vmatprep.subr.mxu0 0.0
    %190 = vmatpush1.msra.mxu0 0.0
    %191 = vmatprep.subr.mxu0 0.0
    %192 = vmatpush1.msra.mxu0 0.0
    %193 = vmatprep.subr.mxu0 0.0
    %194 = vmatpush1.msra.mxu0 0.0
    %195 = vmatprep.subr.mxu0 0.0
    %196 = vmatpush1.msra.mxu0 0.0
    %197 = vmatprep.subr.mxu0 0.0
    %198 = vmatpush1.msra.mxu0 0.0
    %199 = vmatprep.subr.mxu0 0.0
    %200 = vmatpush1.msra.mxu0 0.0
    %201 = vmatprep.mubr.f32.mxu0 0.0
    %202 = vmatmul.mubr.f32.gmra.mrb[0].mxu0 %v127
    %v203 = vpop.f32.mrb[0].mxu0
    %v204 = vadd.f32 0.0, %v203
    %v205 = vpop.f32.mrb[0].mxu0
    %v206 = vadd.f32 0.0, %v205
    %207 = vdwg.mxu0
    %208 = vmatprep.subr.mxu0 %v135
    %209 = vmatpush1.msra.mxu0 %v133
    %210 = vmatprep.subr.mxu0 0.0
    %211 = vmatpush1.msra.mxu0 0.0
    %212 = vmatprep.subr.mxu0 0.0
    %213 = vmatpush1.msra.mxu0 0.0
    %214 = vmatprep.subr.mxu0 0.0
    %215 = vmatpush1.msra.mxu0 0.0
    %216 = vmatprep.subr.mxu0 0.0
    %217 = vmatpush1.msra.mxu0 0.0
    %218 = vmatprep.subr.mxu0 0.0
    %219 = vmatpush1.msra.mxu0 0.0
    %220 = vmatprep.subr.mxu0 0.0
    %221 = vmatpush1.msra.mxu0 0.0
    %222 = vmatprep.subr.mxu0 0.0
    %223 = vmatpush1.msra.mxu0 0.0
    %224 = vmatprep.subr.mxu0 0.0
    %225 = vmatpush1.msra.mxu0 0.0
    %226 = vmatprep.subr.mxu0 0.0
    %227 = vmatpush1.msra.mxu0 0.0
    %228 = vmatprep.subr.mxu0 0.0
    %229 = vmatpush1.msra.mxu0 0.0
    %230 = vmatprep.subr.mxu0 0.0
    %231 = vmatpush1.msra.mxu0 0.0
    %232 = vmatprep.subr.mxu0 0.0
    %233 = vmatpush1.msra.mxu0 0.0
    %234 = vmatprep.subr.mxu0 0.0
    %235 = vmatpush1.msra.mxu0 0.0
    %236 = vmatprep.subr.mxu0 0.0
    %237 = vmatpush1.msra.mxu0 0.0
    %238 = vmatprep.subr.mxu0 0.0
    %239 = vmatpush1.msra.mxu0 0.0
    %240 = vmatprep.subr.mxu0 0.0
    %241 = vmatpush1.msra.mxu0 0.0
    %242 = vmatprep.subr.mxu0 0.0
    %243 = vmatpush1.msra.mxu0 0.0
    %244 = vmatprep.subr.mxu0 0.0
    %245 = vmatpush1.msra.mxu0 0.0
    %246 = vmatprep.subr.mxu0 0.0
    %247 = vmatpush1.msra.mxu0 0.0
    %248 = vmatprep.subr.mxu0 0.0
    %249 = vmatpush1.msra.mxu0 0.0
    %250 = vmatprep.subr.mxu0 0.0
    %251 = vmatpush1.msra.mxu0 0.0
    %252 = vmatprep.subr.mxu0 0.0
    %253 = vmatpush1.msra.mxu0 0.0
    %254 = vmatprep.subr.mxu0 0.0
    %255 = vmatpush1.msra.mxu0 0.0
    %256 = vmatprep.subr.mxu0 0.0
    %257 = vmatpush1.msra.mxu0 0.0
    %258 = vmatprep.subr.mxu0 0.0
    %259 = vmatpush1.msra.mxu0 0.0
    %260 = vmatprep.subr.mxu0 0.0
    %261 = vmatpush1.msra.mxu0 0.0
    %262 = vmatprep.subr.mxu0 0.0
    %263 = vmatpush1.msra.mxu0 0.0
    %264 = vmatprep.subr.mxu0 0.0
    %265 = vmatpush1.msra.mxu0 0.0
    %266 = vmatprep.subr.mxu0 0.0
    %267 = vmatpush1.msra.mxu0 0.0
    %268 = vmatprep.subr.mxu0 0.0
    %269 = vmatpush1.msra.mxu0 0.0
    %270 = vmatprep.subr.mxu0 0.0
    %271 = vmatpush1.msra.mxu0 0.0
    %272 = vmatprep.mubr.f32.mxu0 0.0
    %273 = vmatmul.mubr.f32.gmra.mrb[0].mxu0 %v127
    %v274 = vpop.f32.mrb[0].mxu0
    %v275 = vadd.f32 0.0, %v274
    %v276 = vpop.f32.mrb[0].mxu0
    %v277 = vadd.f32 0.0, %v276
    %278 = vdwg.mxu0
    %v279 = vld [vmem:[%s4] sm:$0xff]
    %v280 = vld [vmem:[%s5] sm:$0xff]
    %v281 = vadd.f32 %v204, %v206
    %v282 = vadd.f32 %v281, %v275
    %v283 = vadd.f32 %v282, %v277
    %284 = vadd.xlane.f32.xlu0 %v283
    %v285 = vpop.xlane.xlu0 %284
    %v286 = vmul.f32 %v285, %v65
    %v287 = vmul.f32 %v204, %v204
    %v288 = vmul.f32 %v206, %v206
    %v289 = vmul.f32 %v275, %v275
    %v290 = vmul.f32 %v277, %v277
    %v291 = vadd.f32 %v287, %v288
    %v292 = vadd.f32 %v291, %v289
    %v293 = vadd.f32 %v292, %v290
    %294 = vadd.xlane.f32.xlu0 %v293
    %v295 = vpop.xlane.xlu0 %294
    %v296 = vmul.f32 %v295, %v65
    %v297 = vmul.f32 %v286, %v286
    %v298 = vsub.f32 %v296, %v297
    %v299 = vadd.f32 %v298, 1e-05
    %v300 = vrsqrt.pop %v299
    %v301 = vmul.f32 %v279, %v300
    %v302 = vmul.f32 %v286, %v301
    %v303 = vsub.f32 %v280, %v302
    %305 = vset.pattern.permute.xlu0 0
    %306 = vperm.xlu0 %305, %v301
    %v307 = vpop.permute.xlu0 %306
    %v309 = vmul.f32 %v204, %v307
    %v310 = vmul.f32 %v206, %v307
    %v311 = vmul.f32 %v275, %v307
    %v312 = vmul.f32 %v277, %v307
    %314 = vset.pattern.permute.xlu0 0
    %315 = vperm.xlu0 %314, %v303
    %v316 = vpop.permute.xlu0 %315
    %v318 = vadd.f32 %v309, %v316
    %v319 = vadd.f32 %v310, %v316
    %v320 = vadd.f32 %v311, %v316
    %v321 = vadd.f32 %v312, %v316
    %v322 = vmax.f32 %v318, 0.0
    %v323 = vmax.f32 %v319, 0.0
    %v324 = vmax.f32 %v320, 0.0
    %v325 = vmax.f32 %v321, 0.0
    %327 = vrot.lane.b32.xlu0 %v325, 17
    %v328 = vpop.permute.xlu0 %327
    %333 = vrot.lane.b32.xlu0 %v322, 17
    %v334 = vpop.permute.xlu0 %333
    %335 = vrot.lane.b32.xlu0 %v323, 17
    %v336 = vpop.permute.xlu0 %335
    %337 = vrot.lane.b32.xlu0 %v324, 17
    %v338 = vpop.permute.xlu0 %337
    %vm339 = vcmask 138240
    %v340 = vsel %vm339, %v334, %v336
    %v341 = vsel %vm339, %v336, %v338
    %v342 = vsel %vm339, %v338, %v328
    %v347 = vsel %vm339, %v328, %v334
    %v348 = vld [vmem:[%s7] ss:$8 sm:$0xf]
    %v350 = vlaneseq
    %v351 = vshrl.u32 %v350, 7
    %v352 = vsub.s32 0, %v351
    %v353 = vrot.slane %v348, %v352
    %v354 = vlaneseq
    %v355 = vshrl.u32 %v354, 7
    %v356 = vsub.s32 1, %v355
    %v357 = vrot.slane %v348, %v356
    %v358 = vlaneseq
    %v359 = vshrl.u32 %v358, 7
    %v360 = vsub.s32 2, %v359
    %v361 = vrot.slane %v348, %v360
    %v362 = vlaneseq
    %v363 = vshrl.u32 %v362, 7
    %v364 = vsub.s32 3, %v363
    %v365 = vrot.slane %v348, %v364
    %v370 = vmul.f32 %v347, %v353
    %v371 = vmul.f32 %v340, %v357
    %v372 = vmul.f32 %v341, %v361
    %v373 = vmul.f32 %v342, %v365
    %374 = vrot.lane.b32.xlu0 %v325, 16
    %v375 = vpop.permute.xlu0 %374
    %377 = vrot.lane.b32.xlu0 %v322, 16
    %v378 = vpop.permute.xlu0 %377
    %379 = vrot.lane.b32.xlu0 %v323, 16
    %v380 = vpop.permute.xlu0 %379
    %381 = vrot.lane.b32.xlu0 %v324, 16
    %v382 = vpop.permute.xlu0 %381
    %vm383 = vcmask 130048
    %v384 = vsel %vm383, %v378, %v380
    %v385 = vsel %vm383, %v380, %v382
    %v386 = vsel %vm383, %v382, %v375
    %v391 = vsel %vm383, %v375, %v378
    %s392 = scalar_lea.vmem %s7, 1
    %v393 = vld [vmem:[%s392] ss:$8 sm:$0xf]
    %v395 = vlaneseq
    %v396 = vshrl.u32 %v395, 7
    %v397 = vsub.s32 0, %v396
    %v398 = vrot.slane %v393, %v397
    %v399 = vlaneseq
    %v400 = vshrl.u32 %v399, 7
    %v401 = vsub.s32 1, %v400
    %v402 = vrot.slane %v393, %v401
    %v403 = vlaneseq
    %v404 = vshrl.u32 %v403, 7
    %v405 = vsub.s32 2, %v404
    %v406 = vrot.slane %v393, %v405
    %v407 = vlaneseq
    %v408 = vshrl.u32 %v407, 7
    %v409 = vsub.s32 3, %v408
    %v410 = vrot.slane %v393, %v409
    %v415 = vmul.f32 %v391, %v398
    %v416 = vmul.f32 %v384, %v402
    %v417 = vmul.f32 %v385, %v406
    %v418 = vmul.f32 %v386, %v410
    %419 = vrot.lane.b32.xlu0 %v325, 15
    %v420 = vpop.permute.xlu0 %419
    %422 = vrot.lane.b32.xlu0 %v322, 15
    %v423 = vpop.permute.xlu0 %422
    %424 = vrot.lane.b32.xlu0 %v323, 15
    %v425 = vpop.permute.xlu0 %424
    %426 = vrot.lane.b32.xlu0 %v324, 15
    %v427 = vpop.permute.xlu0 %426
    %vm428 = vcmask 121856
    %v429 = vsel %vm428, %v423, %v425
    %v430 = vsel %vm428, %v425, %v427
    %v431 = vsel %vm428, %v427, %v420
    %v436 = vsel %vm428, %v420, %v423
    %s437 = scalar_lea.vmem %s7, 2
    %v438 = vld [vmem:[%s437] ss:$8 sm:$0xf]
    %v440 = vlaneseq
    %v441 = vshrl.u32 %v440, 7
    %v442 = vsub.s32 0, %v441
    %v443 = vrot.slane %v438, %v442
    %v444 = vlaneseq
    %v445 = vshrl.u32 %v444, 7
    %v446 = vsub.s32 1, %v445
    %v447 = vrot.slane %v438, %v446
    %v448 = vlaneseq
    %v449 = vshrl.u32 %v448, 7
    %v450 = vsub.s32 2, %v449
    %v451 = vrot.slane %v438, %v450
    %v452 = vlaneseq
    %v453 = vshrl.u32 %v452, 7
    %v454 = vsub.s32 3, %v453
    %v455 = vrot.slane %v438, %v454
    %v460 = vmul.f32 %v436, %v443
    %v461 = vmul.f32 %v429, %v447
    %v462 = vmul.f32 %v430, %v451
    %v463 = vmul.f32 %v431, %v455
    %464 = vrot.lane.b32.xlu0 %v325, 1
    %v465 = vpop.permute.xlu0 %464
    %467 = vrot.lane.b32.xlu0 %v322, 1
    %v468 = vpop.permute.xlu0 %467
    %469 = vrot.lane.b32.xlu0 %v323, 1
    %v470 = vpop.permute.xlu0 %469
    %471 = vrot.lane.b32.xlu0 %v324, 1
    %v472 = vpop.permute.xlu0 %471
    %vm473 = vcmask 7168
    %v474 = vsel %vm473, %v468, %v470
    %v475 = vsel %vm473, %v470, %v472
    %v476 = vsel %vm473, %v472, %v465
    %v481 = vsel %vm473, %v465, %v468
    %s482 = scalar_lea.vmem %s7, 3
    %v483 = vld [vmem:[%s482] ss:$8 sm:$0xf]
    %v485 = vlaneseq
    %v486 = vshrl.u32 %v485, 7
    %v487 = vsub.s32 0, %v486
    %v488 = vrot.slane %v483, %v487
    %v489 = vlaneseq
    %v490 = vshrl.u32 %v489, 7
    %v491 = vsub.s32 1, %v490
    %v492 = vrot.slane %v483, %v491
    %v493 = vlaneseq
    %v494 = vshrl.u32 %v493, 7
    %v495 = vsub.s32 2, %v494
    %v496 = vrot.slane %v483, %v495
    %v497 = vlaneseq
    %v498 = vshrl.u32 %v497, 7
    %v499 = vsub.s32 3, %v498
    %v500 = vrot.slane %v483, %v499
    %v505 = vmul.f32 %v481, %v488
    %v506 = vmul.f32 %v474, %v492
    %v507 = vmul.f32 %v475, %v496
    %v508 = vmul.f32 %v476, %v500
    %s509 = scalar_lea.vmem %s7, 4
    %v510 = vld [vmem:[%s509] ss:$8 sm:$0xf]
    %v512 = vlaneseq
    %v513 = vshrl.u32 %v512, 7
    %v514 = vsub.s32 0, %v513
    %v515 = vrot.slane %v510, %v514
    %v516 = vlaneseq
    %v517 = vshrl.u32 %v516, 7
    %v518 = vsub.s32 1, %v517
    %v519 = vrot.slane %v510, %v518
    %v520 = vlaneseq
    %v521 = vshrl.u32 %v520, 7
    %v522 = vsub.s32 2, %v521
    %v523 = vrot.slane %v510, %v522
    %v524 = vlaneseq
    %v525 = vshrl.u32 %v524, 7
    %v526 = vsub.s32 3, %v525
    %v527 = vrot.slane %v510, %v526
    %v532 = vmul.f32 %v322, %v515
    %v533 = vmul.f32 %v323, %v519
    %v534 = vmul.f32 %v324, %v523
    %v535 = vmul.f32 %v325, %v527
    %536 = vrot.lane.b32.xlu0 %v322, 127
    %v537 = vpop.permute.xlu0 %536
    %538 = vrot.lane.b32.xlu0 %v323, 127
    %v539 = vpop.permute.xlu0 %538
    %540 = vrot.lane.b32.xlu0 %v324, 127
    %v541 = vpop.permute.xlu0 %540
    %542 = vrot.lane.b32.xlu0 %v325, 127
    %v543 = vpop.permute.xlu0 %542
    %vm544 = vcmask 1039360
    %v545 = vsel %vm544, %v537, %v539
    %v546 = vsel %vm544, %v539, %v541
    %v547 = vsel %vm544, %v541, %v543
    %v553 = vsel %vm544, %v543, %v537
    %s554 = scalar_lea.vmem %s7, 5
    %v555 = vld [vmem:[%s554] ss:$8 sm:$0xf]
    %v557 = vlaneseq
    %v558 = vshrl.u32 %v557, 7
    %v559 = vsub.s32 0, %v558
    %v560 = vrot.slane %v555, %v559
    %v561 = vlaneseq
    %v562 = vshrl.u32 %v561, 7
    %v563 = vsub.s32 1, %v562
    %v564 = vrot.slane %v555, %v563
    %v565 = vlaneseq
    %v566 = vshrl.u32 %v565, 7
    %v567 = vsub.s32 2, %v566
    %v568 = vrot.slane %v555, %v567
    %v569 = vlaneseq
    %v570 = vshrl.u32 %v569, 7
    %v571 = vsub.s32 3, %v570
    %v572 = vrot.slane %v555, %v571
    %v577 = vmul.f32 %v545, %v560
    %v578 = vmul.f32 %v546, %v564
    %v579 = vmul.f32 %v547, %v568
    %v580 = vmul.f32 %v553, %v572
    %581 = vrot.lane.b32.xlu0 %v322, 113
    %v582 = vpop.permute.xlu0 %581
    %583 = vrot.lane.b32.xlu0 %v323, 113
    %v584 = vpop.permute.xlu0 %583
    %585 = vrot.lane.b32.xlu0 %v324, 113
    %v586 = vpop.permute.xlu0 %585
    %587 = vrot.lane.b32.xlu0 %v325, 113
    %v588 = vpop.permute.xlu0 %587
    %vm589 = vcmask 924672
    %v590 = vsel %vm589, %v582, %v584
    %v591 = vsel %vm589, %v584, %v586
    %v592 = vsel %vm589, %v586, %v588
    %v598 = vsel %vm589, %v588, %v582
    %s599 = scalar_lea.vmem %s7, 6
    %v600 = vld [vmem:[%s599] ss:$8 sm:$0xf]
    %v602 = vlaneseq
    %v603 = vshrl.u32 %v602, 7
    %v604 = vsub.s32 0, %v603
    %v605 = vrot.slane %v600, %v604
    %v606 = vlaneseq
    %v607 = vshrl.u32 %v606, 7
    %v608 = vsub.s32 1, %v607
    %v609 = vrot.slane %v600, %v608
    %v610 = vlaneseq
    %v611 = vshrl.u32 %v610, 7
    %v612 = vsub.s32 2, %v611
    %v613 = vrot.slane %v600, %v612
    %v614 = vlaneseq
    %v615 = vshrl.u32 %v614, 7
    %v616 = vsub.s32 3, %v615
    %v617 = vrot.slane %v600, %v616
    %v622 = vmul.f32 %v590, %v605
    %v623 = vmul.f32 %v591, %v609
    %v624 = vmul.f32 %v592, %v613
    %v625 = vmul.f32 %v598, %v617
    %626 = vrot.lane.b32.xlu0 %v322, 112
    %v627 = vpop.permute.xlu0 %626
    %628 = vrot.lane.b32.xlu0 %v323, 112
    %v629 = vpop.permute.xlu0 %628
    %630 = vrot.lane.b32.xlu0 %v324, 112
    %v631 = vpop.permute.xlu0 %630
    %632 = vrot.lane.b32.xlu0 %v325, 112
    %v633 = vpop.permute.xlu0 %632
    %vm634 = vcmask 916480
    %v635 = vsel %vm634, %v627, %v629
    %v636 = vsel %vm634, %v629, %v631
    %v637 = vsel %vm634, %v631, %v633
    %v643 = vsel %vm634, %v633, %v627
    %s644 = scalar_lea.vmem %s7, 7
    %v645 = vld [vmem:[%s644] ss:$8 sm:$0xf]
    %v647 = vlaneseq
    %v648 = vshrl.u32 %v647, 7
    %v649 = vsub.s32 0, %v648
    %v650 = vrot.slane %v645, %v649
    %v651 = vlaneseq
    %v652 = vshrl.u32 %v651, 7
    %v653 = vsub.s32 1, %v652
    %v654 = vrot.slane %v645, %v653
    %v655 = vlaneseq
    %v656 = vshrl.u32 %v655, 7
    %v657 = vsub.s32 2, %v656
    %v658 = vrot.slane %v645, %v657
    %v659 = vlaneseq
    %v660 = vshrl.u32 %v659, 7
    %v661 = vsub.s32 3, %v660
    %v662 = vrot.slane %v645, %v661
    %v667 = vmul.f32 %v635, %v650
    %v668 = vmul.f32 %v636, %v654
    %v669 = vmul.f32 %v637, %v658
    %v670 = vmul.f32 %v643, %v662
    %671 = vrot.lane.b32.xlu0 %v322, 111
    %v672 = vpop.permute.xlu0 %671
    %673 = vrot.lane.b32.xlu0 %v323, 111
    %v674 = vpop.permute.xlu0 %673
    %675 = vrot.lane.b32.xlu0 %v324, 111
    %v676 = vpop.permute.xlu0 %675
    %677 = vrot.lane.b32.xlu0 %v325, 111
    %v678 = vpop.permute.xlu0 %677
    %vm679 = vcmask 908288
    %v680 = vsel %vm679, %v672, %v674
    %v681 = vsel %vm679, %v674, %v676
    %v682 = vsel %vm679, %v676, %v678
    %v688 = vsel %vm679, %v678, %v672
    %s689 = scalar_lea.vmem %s7, 32
    %v690 = vld [vmem:[%s689] ss:$8 sm:$0xf]
    %v692 = vlaneseq
    %v693 = vshrl.u32 %v692, 7
    %v694 = vsub.s32 0, %v693
    %v695 = vrot.slane %v690, %v694
    %v696 = vlaneseq
    %v697 = vshrl.u32 %v696, 7
    %v698 = vsub.s32 1, %v697
    %v699 = vrot.slane %v690, %v698
    %v700 = vlaneseq
    %v701 = vshrl.u32 %v700, 7
    %v702 = vsub.s32 2, %v701
    %v703 = vrot.slane %v690, %v702
    %v704 = vlaneseq
    %v705 = vshrl.u32 %v704, 7
    %v706 = vsub.s32 3, %v705
    %v707 = vrot.slane %v690, %v706
    %v712 = vmul.f32 %v680, %v695
    %v713 = vmul.f32 %v681, %v699
    %v714 = vmul.f32 %v682, %v703
    %v715 = vmul.f32 %v688, %v707
    %v716 = vld [vmem:[%s6] sm:$0xff]
    %vm717 = vcmask 588800
    %v719 = vsel %vm717, %v716, 0
    %721 = vmatprep.subr.mxu0 %v371
    %722 = vmatpush1.msra.mxu0 %v370
    %723 = vmatprep.subr.mxu0 %v416
    %724 = vmatpush1.msra.mxu0 %v415
    %725 = vmatprep.subr.mxu0 %v461
    %726 = vmatpush1.msra.mxu0 %v460
    %727 = vmatprep.subr.mxu0 %v506
    %728 = vmatpush1.msra.mxu0 %v505
    %729 = vmatprep.subr.mxu0 %v533
    %730 = vmatpush1.msra.mxu0 %v532
    %731 = vmatprep.subr.mxu0 %v578
    %732 = vmatpush1.msra.mxu0 %v577
    %733 = vmatprep.subr.mxu0 %v623
    %734 = vmatpush1.msra.mxu0 %v622
    %735 = vmatprep.subr.mxu0 %v668
    %736 = vmatpush1.msra.mxu0 %v667
    %737 = vmatprep.subr.mxu0 %v713
    %738 = vmatpush1.msra.mxu0 %v712
    %739 = vmatprep.subr.mxu0 0.0
    %740 = vmatpush1.msra.mxu0 0.0
    %741 = vmatprep.subr.mxu0 0.0
    %742 = vmatpush1.msra.mxu0 0.0
    %743 = vmatprep.subr.mxu0 0.0
    %744 = vmatpush1.msra.mxu0 0.0
    %745 = vmatprep.subr.mxu0 0.0
    %746 = vmatpush1.msra.mxu0 0.0
    %747 = vmatprep.subr.mxu0 0.0
    %748 = vmatpush1.msra.mxu0 0.0
    %749 = vmatprep.subr.mxu0 0.0
    %750 = vmatpush1.msra.mxu0 0.0
    %751 = vmatprep.subr.mxu0 0.0
    %752 = vmatpush1.msra.mxu0 0.0
    %753 = vmatprep.subr.mxu0 0.0
    %754 = vmatpush1.msra.mxu0 0.0
    %755 = vmatprep.subr.mxu0 0.0
    %756 = vmatpush1.msra.mxu0 0.0
    %757 = vmatprep.subr.mxu0 0.0
    %758 = vmatpush1.msra.mxu0 0.0
    %759 = vmatprep.subr.mxu0 0.0
    %760 = vmatpush1.msra.mxu0 0.0
    %761 = vmatprep.subr.mxu0 0.0
    %762 = vmatpush1.msra.mxu0 0.0
    %763 = vmatprep.subr.mxu0 0.0
    %764 = vmatpush1.msra.mxu0 0.0
    %765 = vmatprep.subr.mxu0 0.0
    %766 = vmatpush1.msra.mxu0 0.0
    %767 = vmatprep.subr.mxu0 0.0
    %768 = vmatpush1.msra.mxu0 0.0
    %769 = vmatprep.subr.mxu0 0.0
    %770 = vmatpush1.msra.mxu0 0.0
    %771 = vmatprep.subr.mxu0 0.0
    %772 = vmatpush1.msra.mxu0 0.0
    %773 = vmatprep.subr.mxu0 0.0
    %774 = vmatpush1.msra.mxu0 0.0
    %775 = vmatprep.subr.mxu0 0.0
    %776 = vmatpush1.msra.mxu0 0.0
    %777 = vmatprep.subr.mxu0 0.0
    %778 = vmatpush1.msra.mxu0 0.0
    %779 = vmatprep.subr.mxu0 0.0
    %780 = vmatpush1.msra.mxu0 0.0
    %781 = vmatprep.subr.mxu0 0.0
    %782 = vmatpush1.msra.mxu0 0.0
    %783 = vmatprep.subr.mxu0 0.0
    %784 = vmatpush1.msra.mxu0 0.0
    %785 = vmatprep.mubr.f32.mxu0 0.0
    %786 = vmatmul.mubr.f32.gmra.mrb[0].mxu0 %v719
    %v787 = vpop.f32.mrb[0].mxu0
    %v788 = vadd.f32 0.0, %v787
    %v789 = vpop.f32.mrb[0].mxu0
    %v790 = vadd.f32 0.0, %v789
    %791 = vdwg.mxu0
    %792 = vmatprep.subr.mxu0 %v373
    %793 = vmatpush1.msra.mxu0 %v372
    %794 = vmatprep.subr.mxu0 %v418
    %795 = vmatpush1.msra.mxu0 %v417
    %796 = vmatprep.subr.mxu0 %v463
    %797 = vmatpush1.msra.mxu0 %v462
    %798 = vmatprep.subr.mxu0 %v508
    %799 = vmatpush1.msra.mxu0 %v507
    %800 = vmatprep.subr.mxu0 %v535
    %801 = vmatpush1.msra.mxu0 %v534
    %802 = vmatprep.subr.mxu0 %v580
    %803 = vmatpush1.msra.mxu0 %v579
    %804 = vmatprep.subr.mxu0 %v625
    %805 = vmatpush1.msra.mxu0 %v624
    %806 = vmatprep.subr.mxu0 %v670
    %807 = vmatpush1.msra.mxu0 %v669
    %808 = vmatprep.subr.mxu0 %v715
    %809 = vmatpush1.msra.mxu0 %v714
    %810 = vmatprep.subr.mxu0 0.0
    %811 = vmatpush1.msra.mxu0 0.0
    %812 = vmatprep.subr.mxu0 0.0
    %813 = vmatpush1.msra.mxu0 0.0
    %814 = vmatprep.subr.mxu0 0.0
    %815 = vmatpush1.msra.mxu0 0.0
    %816 = vmatprep.subr.mxu0 0.0
    %817 = vmatpush1.msra.mxu0 0.0
    %818 = vmatprep.subr.mxu0 0.0
    %819 = vmatpush1.msra.mxu0 0.0
    %820 = vmatprep.subr.mxu0 0.0
    %821 = vmatpush1.msra.mxu0 0.0
    %822 = vmatprep.subr.mxu0 0.0
    %823 = vmatpush1.msra.mxu0 0.0
    %824 = vmatprep.subr.mxu0 0.0
    %825 = vmatpush1.msra.mxu0 0.0
    %826 = vmatprep.subr.mxu0 0.0
    %827 = vmatpush1.msra.mxu0 0.0
    %828 = vmatprep.subr.mxu0 0.0
    %829 = vmatpush1.msra.mxu0 0.0
    %830 = vmatprep.subr.mxu0 0.0
    %831 = vmatpush1.msra.mxu0 0.0
    %832 = vmatprep.subr.mxu0 0.0
    %833 = vmatpush1.msra.mxu0 0.0
    %834 = vmatprep.subr.mxu0 0.0
    %835 = vmatpush1.msra.mxu0 0.0
    %836 = vmatprep.subr.mxu0 0.0
    %837 = vmatpush1.msra.mxu0 0.0
    %838 = vmatprep.subr.mxu0 0.0
    %839 = vmatpush1.msra.mxu0 0.0
    %840 = vmatprep.subr.mxu0 0.0
    %841 = vmatpush1.msra.mxu0 0.0
    %842 = vmatprep.subr.mxu0 0.0
    %843 = vmatpush1.msra.mxu0 0.0
    %844 = vmatprep.subr.mxu0 0.0
    %845 = vmatpush1.msra.mxu0 0.0
    %846 = vmatprep.subr.mxu0 0.0
    %847 = vmatpush1.msra.mxu0 0.0
    %848 = vmatprep.subr.mxu0 0.0
    %849 = vmatpush1.msra.mxu0 0.0
    %850 = vmatprep.subr.mxu0 0.0
    %851 = vmatpush1.msra.mxu0 0.0
    %852 = vmatprep.subr.mxu0 0.0
    %853 = vmatpush1.msra.mxu0 0.0
    %854 = vmatprep.subr.mxu0 0.0
    %855 = vmatpush1.msra.mxu0 0.0
    %856 = vmatprep.mubr.f32.mxu0 0.0
    %857 = vmatmul.mubr.f32.gmra.mrb[0].mxu0 %v719
    %v858 = vpop.f32.mrb[0].mxu0
    %v859 = vadd.f32 0.0, %v858
    %v860 = vpop.f32.mrb[0].mxu0
    %v861 = vadd.f32 0.0, %v860
    %862 = vdwg.mxu0
    %v863 = vld [vmem:[%s8] sm:$0xff]
    %v864 = vld [vmem:[%s9] sm:$0xff]
    %v865 = vadd.f32 %v788, %v790
    %v866 = vadd.f32 %v865, %v859
    %v867 = vadd.f32 %v866, %v861
    %868 = vadd.xlane.f32.xlu0 %v867
    %v869 = vpop.xlane.xlu0 %868
    %v870 = vmul.f32 %v869, %v65
    %v871 = vmul.f32 %v788, %v788
    %v872 = vmul.f32 %v790, %v790
    %v873 = vmul.f32 %v859, %v859
    %v874 = vmul.f32 %v861, %v861
    %v875 = vadd.f32 %v871, %v872
    %v876 = vadd.f32 %v875, %v873
    %v877 = vadd.f32 %v876, %v874
    %878 = vadd.xlane.f32.xlu0 %v877
    %v879 = vpop.xlane.xlu0 %878
    %v880 = vmul.f32 %v879, %v65
    %v881 = vmul.f32 %v870, %v870
    %v882 = vsub.f32 %v880, %v881
    %v883 = vadd.f32 %v882, 1e-05
    %v884 = vrsqrt.pop %v883
    %v885 = vmul.f32 %v863, %v884
    %v886 = vmul.f32 %v870, %v885
    %v887 = vsub.f32 %v864, %v886
    %889 = vset.pattern.permute.xlu0 0
    %890 = vperm.xlu0 %889, %v885
    %v891 = vpop.permute.xlu0 %890
    %v893 = vmul.f32 %v788, %v891
    %v894 = vmul.f32 %v790, %v891
    %v895 = vmul.f32 %v859, %v891
    %v896 = vmul.f32 %v861, %v891
    %898 = vset.pattern.permute.xlu0 0
    %899 = vperm.xlu0 %898, %v887
    %v900 = vpop.permute.xlu0 %899
    %v902 = vadd.f32 %v893, %v900
    %v903 = vadd.f32 %v894, %v900
    %v904 = vadd.f32 %v895, %v900
    %v905 = vadd.f32 %v896, %v900
    %v906 = vmax.f32 %v902, 0.0
    %v907 = vmax.f32 %v903, 0.0
    %v908 = vmax.f32 %v904, 0.0
    %v909 = vmax.f32 %v905, 0.0
    %v910 = vld [vmem:[%s10] sm:$0xff]
    %v911 = vld [vmem:[%s10 + $0x8] sm:$0xff]
    %v912 = vld [vmem:[%s10 + $0x10] sm:$0xff]
    %v913 = vld [vmem:[%s10 + $0x18] sm:$0xff]
    %vm914 = vcmask 64512
    %v916 = vsel %vm914, %v910, 0
    %v919 = vsel %vm914, %v911, 0
    %v922 = vsel %vm914, %v912, 0
    %v925 = vsel %vm914, %v913, 0
    %927 = vmatprep.subr.mxu0 %v907
    %928 = vmatpush1.msra.mxu0 %v906
    %929 = vmatprep.subr.mxu0 0.0
    %930 = vmatpush1.msra.mxu0 0.0
    %931 = vmatprep.subr.mxu0 0.0
    %932 = vmatpush1.msra.mxu0 0.0
    %933 = vmatprep.subr.mxu0 0.0
    %934 = vmatpush1.msra.mxu0 0.0
    %935 = vmatprep.subr.mxu0 0.0
    %936 = vmatpush1.msra.mxu0 0.0
    %937 = vmatprep.subr.mxu0 0.0
    %938 = vmatpush1.msra.mxu0 0.0
    %939 = vmatprep.subr.mxu0 0.0
    %940 = vmatpush1.msra.mxu0 0.0
    %941 = vmatprep.subr.mxu0 0.0
    %942 = vmatpush1.msra.mxu0 0.0
    %943 = vmatprep.subr.mxu0 0.0
    %944 = vmatpush1.msra.mxu0 0.0
    %945 = vmatprep.subr.mxu0 0.0
    %946 = vmatpush1.msra.mxu0 0.0
    %947 = vmatprep.subr.mxu0 0.0
    %948 = vmatpush1.msra.mxu0 0.0
    %949 = vmatprep.subr.mxu0 0.0
    %950 = vmatpush1.msra.mxu0 0.0
    %951 = vmatprep.subr.mxu0 0.0
    %952 = vmatpush1.msra.mxu0 0.0
    %953 = vmatprep.subr.mxu0 0.0
    %954 = vmatpush1.msra.mxu0 0.0
    %955 = vmatprep.subr.mxu0 0.0
    %956 = vmatpush1.msra.mxu0 0.0
    %957 = vmatprep.subr.mxu0 0.0
    %958 = vmatpush1.msra.mxu0 0.0
    %959 = vmatprep.subr.mxu0 0.0
    %960 = vmatpush1.msra.mxu0 0.0
    %961 = vmatprep.subr.mxu0 0.0
    %962 = vmatpush1.msra.mxu0 0.0
    %963 = vmatprep.subr.mxu0 0.0
    %964 = vmatpush1.msra.mxu0 0.0
    %965 = vmatprep.subr.mxu0 0.0
    %966 = vmatpush1.msra.mxu0 0.0
    %967 = vmatprep.subr.mxu0 0.0
    %968 = vmatpush1.msra.mxu0 0.0
    %969 = vmatprep.subr.mxu0 0.0
    %970 = vmatpush1.msra.mxu0 0.0
    %971 = vmatprep.subr.mxu0 0.0
    %972 = vmatpush1.msra.mxu0 0.0
    %973 = vmatprep.subr.mxu0 0.0
    %974 = vmatpush1.msra.mxu0 0.0
    %975 = vmatprep.subr.mxu0 0.0
    %976 = vmatpush1.msra.mxu0 0.0
    %977 = vmatprep.subr.mxu0 0.0
    %978 = vmatpush1.msra.mxu0 0.0
    %979 = vmatprep.subr.mxu0 0.0
    %980 = vmatpush1.msra.mxu0 0.0
    %981 = vmatprep.subr.mxu0 0.0
    %982 = vmatpush1.msra.mxu0 0.0
    %983 = vmatprep.subr.mxu0 0.0
    %984 = vmatpush1.msra.mxu0 0.0
    %985 = vmatprep.subr.mxu0 0.0
    %986 = vmatpush1.msra.mxu0 0.0
    %987 = vmatprep.subr.mxu0 0.0
    %988 = vmatpush1.msra.mxu0 0.0
    %989 = vmatprep.subr.mxu0 0.0
    %990 = vmatpush1.msra.mxu0 0.0
    %991 = vmatprep.mubr.f32.mxu0 0.0
    %992 = vmatmul.mubr.f32.gmra.mrb[0].mxu0 %v916
    %v993 = vpop.f32.mrb[0].mxu0
    %v994 = vadd.f32 0.0, %v993
    %v995 = vpop.f32.mrb[0].mxu0
    %v996 = vadd.f32 0.0, %v995
    %997 = vmatprep.mubr.f32.mxu0 0.0
    %998 = vmatmul.mubr.f32.gmra.mrb[0].mxu0 %v919
    %v999 = vpop.f32.mrb[0].mxu0
    %v1000 = vadd.f32 0.0, %v999
    %v1001 = vpop.f32.mrb[0].mxu0
    %v1002 = vadd.f32 0.0, %v1001
    %1003 = vmatprep.mubr.f32.mxu0 0.0
    %1004 = vmatmul.mubr.f32.gmra.mrb[0].mxu0 %v922
    %v1005 = vpop.f32.mrb[0].mxu0
    %v1006 = vadd.f32 0.0, %v1005
    %v1007 = vpop.f32.mrb[0].mxu0
    %v1008 = vadd.f32 0.0, %v1007
    %1009 = vmatprep.mubr.f32.mxu0 0.0
    %1010 = vmatmul.mubr.f32.gmra.mrb[0].mxu0 %v925
    %v1011 = vpop.f32.mrb[0].mxu0
    %v1012 = vadd.f32 0.0, %v1011
    %v1013 = vpop.f32.mrb[0].mxu0
    %v1014 = vadd.f32 0.0, %v1013
    %1015 = vdwg.mxu0
    %1016 = vmatprep.subr.mxu0 %v909
    %1017 = vmatpush1.msra.mxu0 %v908
    %1018 = vmatprep.subr.mxu0 0.0
    %1019 = vmatpush1.msra.mxu0 0.0
    %1020 = vmatprep.subr.mxu0 0.0
    %1021 = vmatpush1.msra.mxu0 0.0
    %1022 = vmatprep.subr.mxu0 0.0
    %1023 = vmatpush1.msra.mxu0 0.0
    %1024 = vmatprep.subr.mxu0 0.0
    %1025 = vmatpush1.msra.mxu0 0.0
    %1026 = vmatprep.subr.mxu0 0.0
    %1027 = vmatpush1.msra.mxu0 0.0
    %1028 = vmatprep.subr.mxu0 0.0
    %1029 = vmatpush1.msra.mxu0 0.0
    %1030 = vmatprep.subr.mxu0 0.0
    %1031 = vmatpush1.msra.mxu0 0.0
    %1032 = vmatprep.subr.mxu0 0.0
    %1033 = vmatpush1.msra.mxu0 0.0
    %1034 = vmatprep.subr.mxu0 0.0
    %1035 = vmatpush1.msra.mxu0 0.0
    %1036 = vmatprep.subr.mxu0 0.0
    %1037 = vmatpush1.msra.mxu0 0.0
    %1038 = vmatprep.subr.mxu0 0.0
    %1039 = vmatpush1.msra.mxu0 0.0
    %1040 = vmatprep.subr.mxu0 0.0
    %1041 = vmatpush1.msra.mxu0 0.0
    %1042 = vmatprep.subr.mxu0 0.0
    %1043 = vmatpush1.msra.mxu0 0.0
    %1044 = vmatprep.subr.mxu0 0.0
    %1045 = vmatpush1.msra.mxu0 0.0
    %1046 = vmatprep.subr.mxu0 0.0
    %1047 = vmatpush1.msra.mxu0 0.0
    %1048 = vmatprep.subr.mxu0 0.0
    %1049 = vmatpush1.msra.mxu0 0.0
    %1050 = vmatprep.subr.mxu0 0.0
    %1051 = vmatpush1.msra.mxu0 0.0
    %1052 = vmatprep.subr.mxu0 0.0
    %1053 = vmatpush1.msra.mxu0 0.0
    %1054 = vmatprep.subr.mxu0 0.0
    %1055 = vmatpush1.msra.mxu0 0.0
    %1056 = vmatprep.subr.mxu0 0.0
    %1057 = vmatpush1.msra.mxu0 0.0
    %1058 = vmatprep.subr.mxu0 0.0
    %1059 = vmatpush1.msra.mxu0 0.0
    %1060 = vmatprep.subr.mxu0 0.0
    %1061 = vmatpush1.msra.mxu0 0.0
    %1062 = vmatprep.subr.mxu0 0.0
    %1063 = vmatpush1.msra.mxu0 0.0
    %1064 = vmatprep.subr.mxu0 0.0
    %1065 = vmatpush1.msra.mxu0 0.0
    %1066 = vmatprep.subr.mxu0 0.0
    %1067 = vmatpush1.msra.mxu0 0.0
    %1068 = vmatprep.subr.mxu0 0.0
    %1069 = vmatpush1.msra.mxu0 0.0
    %1070 = vmatprep.subr.mxu0 0.0
    %1071 = vmatpush1.msra.mxu0 0.0
    %1072 = vmatprep.subr.mxu0 0.0
    %1073 = vmatpush1.msra.mxu0 0.0
    %1074 = vmatprep.subr.mxu0 0.0
    %1075 = vmatpush1.msra.mxu0 0.0
    %1076 = vmatprep.subr.mxu0 0.0
    %1077 = vmatpush1.msra.mxu0 0.0
    %1078 = vmatprep.subr.mxu0 0.0
    %1079 = vmatpush1.msra.mxu0 0.0
    %1080 = vmatprep.mubr.f32.mxu0 0.0
    %1081 = vmatmul.mubr.f32.gmra.mrb[0].mxu0 %v916
    %v1082 = vpop.f32.mrb[0].mxu0
    %v1083 = vadd.f32 0.0, %v1082
    %v1084 = vpop.f32.mrb[0].mxu0
    %v1085 = vadd.f32 0.0, %v1084
    %1086 = vmatprep.mubr.f32.mxu0 0.0
    %1087 = vmatmul.mubr.f32.gmra.mrb[0].mxu0 %v919
    %v1088 = vpop.f32.mrb[0].mxu0
    %v1089 = vadd.f32 0.0, %v1088
    %v1090 = vpop.f32.mrb[0].mxu0
    %v1091 = vadd.f32 0.0, %v1090
    %1092 = vmatprep.mubr.f32.mxu0 0.0
    %1093 = vmatmul.mubr.f32.gmra.mrb[0].mxu0 %v922
    %v1094 = vpop.f32.mrb[0].mxu0
    %v1095 = vadd.f32 0.0, %v1094
    %v1096 = vpop.f32.mrb[0].mxu0
    %v1097 = vadd.f32 0.0, %v1096
    %1098 = vmatprep.mubr.f32.mxu0 0.0
    %1099 = vmatmul.mubr.f32.gmra.mrb[0].mxu0 %v925
    %v1100 = vpop.f32.mrb[0].mxu0
    %v1101 = vadd.f32 0.0, %v1100
    %v1102 = vpop.f32.mrb[0].mxu0
    %v1103 = vadd.f32 0.0, %v1102
    %1104 = vdwg.mxu0
    %v1105 = vld [vmem:[%s11] sm:$0xff]
    %v1106 = vld [vmem:[%s11 + $0x8] sm:$0xff]
    %v1107 = vld [vmem:[%s11 + $0x10] sm:$0xff]
    %v1108 = vld [vmem:[%s11 + $0x18] sm:$0xff]
    %v1109 = vld [vmem:[%s12] sm:$0xff]
    %v1110 = vld [vmem:[%s12 + $0x8] sm:$0xff]
    %v1111 = vld [vmem:[%s12 + $0x10] sm:$0xff]
    %v1112 = vld [vmem:[%s12 + $0x18] sm:$0xff]
    %v1113 = vadd.f32 %v994, %v996
    %v1114 = vadd.f32 %v1113, %v1083
    %v1115 = vadd.f32 %v1114, %v1085
    %1116 = vadd.xlane.f32.xlu0 %v1115
    %v1117 = vpop.xlane.xlu0 %1116
    %v1118 = vadd.f32 %v1000, %v1002
    %v1119 = vadd.f32 %v1118, %v1089
    %v1120 = vadd.f32 %v1119, %v1091
    %1121 = vadd.xlane.f32.xlu0 %v1120
    %v1122 = vpop.xlane.xlu0 %1121
    %v1123 = vadd.f32 %v1006, %v1008
    %v1124 = vadd.f32 %v1123, %v1095
    %v1125 = vadd.f32 %v1124, %v1097
    %1126 = vadd.xlane.f32.xlu0 %v1125
    %v1127 = vpop.xlane.xlu0 %1126
    %v1128 = vadd.f32 %v1012, %v1014
    %v1129 = vadd.f32 %v1128, %v1101
    %v1130 = vadd.f32 %v1129, %v1103
    %1131 = vadd.xlane.f32.xlu0 %v1130
    %v1132 = vpop.xlane.xlu0 %1131
    %v1133 = vmul.f32 %v1117, %v65
    %v1134 = vmul.f32 %v1122, %v65
    %v1135 = vmul.f32 %v1127, %v65
    %v1136 = vmul.f32 %v1132, %v65
    %v1137 = vmul.f32 %v994, %v994
    %v1138 = vmul.f32 %v996, %v996
    %v1139 = vmul.f32 %v1083, %v1083
    %v1140 = vmul.f32 %v1085, %v1085
    %v1141 = vmul.f32 %v1000, %v1000
    %v1142 = vmul.f32 %v1002, %v1002
    %v1143 = vmul.f32 %v1089, %v1089
    %v1144 = vmul.f32 %v1091, %v1091
    %v1145 = vmul.f32 %v1006, %v1006
    %v1146 = vmul.f32 %v1008, %v1008
    %v1147 = vmul.f32 %v1095, %v1095
    %v1148 = vmul.f32 %v1097, %v1097
    %v1149 = vmul.f32 %v1012, %v1012
    %v1150 = vmul.f32 %v1014, %v1014
    %v1151 = vmul.f32 %v1101, %v1101
    %v1152 = vmul.f32 %v1103, %v1103
    %v1153 = vadd.f32 %v1137, %v1138
    %v1154 = vadd.f32 %v1153, %v1139
    %v1155 = vadd.f32 %v1154, %v1140
    %1156 = vadd.xlane.f32.xlu0 %v1155
    %v1157 = vpop.xlane.xlu0 %1156
    %v1158 = vadd.f32 %v1141, %v1142
    %v1159 = vadd.f32 %v1158, %v1143
    %v1160 = vadd.f32 %v1159, %v1144
    %1161 = vadd.xlane.f32.xlu0 %v1160
    %v1162 = vpop.xlane.xlu0 %1161
    %v1163 = vadd.f32 %v1145, %v1146
    %v1164 = vadd.f32 %v1163, %v1147
    %v1165 = vadd.f32 %v1164, %v1148
    %1166 = vadd.xlane.f32.xlu0 %v1165
    %v1167 = vpop.xlane.xlu0 %1166
    %v1168 = vadd.f32 %v1149, %v1150
    %v1169 = vadd.f32 %v1168, %v1151
    %v1170 = vadd.f32 %v1169, %v1152
    %1171 = vadd.xlane.f32.xlu0 %v1170
    %v1172 = vpop.xlane.xlu0 %1171
    %v1173 = vmul.f32 %v1157, %v65
    %v1174 = vmul.f32 %v1162, %v65
    %v1175 = vmul.f32 %v1167, %v65
    %v1176 = vmul.f32 %v1172, %v65
    %v1177 = vmul.f32 %v1133, %v1133
    %v1178 = vmul.f32 %v1134, %v1134
    %v1179 = vmul.f32 %v1135, %v1135
    %v1180 = vmul.f32 %v1136, %v1136
    %v1181 = vsub.f32 %v1173, %v1177
    %v1182 = vsub.f32 %v1174, %v1178
    %v1183 = vsub.f32 %v1175, %v1179
    %v1184 = vsub.f32 %v1176, %v1180
    %v1185 = vadd.f32 %v1181, 1e-05
    %v1186 = vadd.f32 %v1182, 1e-05
    %v1187 = vadd.f32 %v1183, 1e-05
    %v1188 = vadd.f32 %v1184, 1e-05
    %v1189 = vrsqrt.pop %v1185
    %v1190 = vrsqrt.pop %v1186
    %v1191 = vrsqrt.pop %v1187
    %v1192 = vrsqrt.pop %v1188
    %v1193 = vmul.f32 %v1105, %v1189
    %v1194 = vmul.f32 %v1106, %v1190
    %v1195 = vmul.f32 %v1107, %v1191
    %v1196 = vmul.f32 %v1108, %v1192
    %v1197 = vmul.f32 %v1133, %v1193
    %v1198 = vmul.f32 %v1134, %v1194
    %v1199 = vmul.f32 %v1135, %v1195
    %v1200 = vmul.f32 %v1136, %v1196
    %v1201 = vsub.f32 %v1109, %v1197
    %v1202 = vsub.f32 %v1110, %v1198
    %v1203 = vsub.f32 %v1111, %v1199
    %v1204 = vsub.f32 %v1112, %v1200
    %1206 = vset.pattern.permute.xlu0 0
    %1207 = vperm.xlu0 %1206, %v1193
    %v1208 = vpop.permute.xlu0 %1207
    %1211 = vset.pattern.permute.xlu0 0
    %1212 = vperm.xlu0 %1211, %v1194
    %v1213 = vpop.permute.xlu0 %1212
    %1216 = vset.pattern.permute.xlu0 0
    %1217 = vperm.xlu0 %1216, %v1195
    %v1218 = vpop.permute.xlu0 %1217
    %1221 = vset.pattern.permute.xlu0 0
    %1222 = vperm.xlu0 %1221, %v1196
    %v1223 = vpop.permute.xlu0 %1222
    %v1225 = vmul.f32 %v994, %v1208
    %v1226 = vmul.f32 %v996, %v1208
    %v1227 = vmul.f32 %v1083, %v1208
    %v1228 = vmul.f32 %v1085, %v1208
    %v1229 = vmul.f32 %v1000, %v1213
    %v1230 = vmul.f32 %v1002, %v1213
    %v1231 = vmul.f32 %v1089, %v1213
    %v1232 = vmul.f32 %v1091, %v1213
    %v1233 = vmul.f32 %v1006, %v1218
    %v1234 = vmul.f32 %v1008, %v1218
    %v1235 = vmul.f32 %v1095, %v1218
    %v1236 = vmul.f32 %v1097, %v1218
    %v1237 = vmul.f32 %v1012, %v1223
    %v1238 = vmul.f32 %v1014, %v1223
    %v1239 = vmul.f32 %v1101, %v1223
    %v1240 = vmul.f32 %v1103, %v1223
    %1242 = vset.pattern.permute.xlu0 0
    %1243 = vperm.xlu0 %1242, %v1201
    %v1244 = vpop.permute.xlu0 %1243
    %1247 = vset.pattern.permute.xlu0 0
    %1248 = vperm.xlu0 %1247, %v1202
    %v1249 = vpop.permute.xlu0 %1248
    %1252 = vset.pattern.permute.xlu0 0
    %1253 = vperm.xlu0 %1252, %v1203
    %v1254 = vpop.permute.xlu0 %1253
    %1257 = vset.pattern.permute.xlu0 0
    %1258 = vperm.xlu0 %1257, %v1204
    %v1259 = vpop.permute.xlu0 %1258
    %v1261 = vadd.f32 %v1225, %v1244
    %v1262 = vadd.f32 %v1226, %v1244
    %v1263 = vadd.f32 %v1227, %v1244
    %v1264 = vadd.f32 %v1228, %v1244
    %v1265 = vadd.f32 %v1229, %v1249
    %v1266 = vadd.f32 %v1230, %v1249
    %v1267 = vadd.f32 %v1231, %v1249
    %v1268 = vadd.f32 %v1232, %v1249
    %v1269 = vadd.f32 %v1233, %v1254
    %v1270 = vadd.f32 %v1234, %v1254
    %v1271 = vadd.f32 %v1235, %v1254
    %v1272 = vadd.f32 %v1236, %v1254
    %v1273 = vadd.f32 %v1237, %v1259
    %v1274 = vadd.f32 %v1238, %v1259
    %v1275 = vadd.f32 %v1239, %v1259
    %v1276 = vadd.f32 %v1240, %v1259
    %1277 = vst [vmem:[#allocation2] sm:$0xff] %v1261
    %1278 = vst [vmem:[#allocation2 + $0x8] sm:$0xff] %v1262
    %1279 = vst [vmem:[#allocation2 + $0x10] sm:$0xff] %v1263
    %1280 = vst [vmem:[#allocation2 + $0x18] sm:$0xff] %v1264
    %1281 = vst [vmem:[#allocation2 + $0x20] sm:$0xff] %v1265
    %1282 = vst [vmem:[#allocation2 + $0x28] sm:$0xff] %v1266
    %1283 = vst [vmem:[#allocation2 + $0x30] sm:$0xff] %v1267
    %1284 = vst [vmem:[#allocation2 + $0x38] sm:$0xff] %v1268
    %1285 = vst [vmem:[#allocation2 + $0x40] sm:$0xff] %v1269
    %1286 = vst [vmem:[#allocation2 + $0x48] sm:$0xff] %v1270
    %1287 = vst [vmem:[#allocation2 + $0x50] sm:$0xff] %v1271
    %1288 = vst [vmem:[#allocation2 + $0x58] sm:$0xff] %v1272
    %1289 = vst [vmem:[#allocation2 + $0x60] sm:$0xff] %v1273
    %1290 = vst [vmem:[#allocation2 + $0x68] sm:$0xff] %v1274
    %1291 = vst [vmem:[#allocation2 + $0x70] sm:$0xff] %v1275
    %1292 = vst [vmem:[#allocation2 + $0x78] sm:$0xff] %v1276
    %v1293 = vadd.f32 %v1261, %v45
    %v1294 = vadd.f32 %v1262, %v51
    %v1295 = vadd.f32 %v1263, %v46
    %v1296 = vadd.f32 %v1264, %v52
    %1297 = vst [vmem:[#allocation2] sm:$0xf] %v1293
    %1298 = vst [vmem:[#allocation2 + $0x8] sm:$0xf] %v1294
    %1299 = vst [vmem:[#allocation2 + $0x10] sm:$0xf] %v1295
    %1300 = vst [vmem:[#allocation2 + $0x18] sm:$0xf] %v1296
    // Predicated region
    $region54: #{tpu_custom_call.1} parent=1 // pred_check
      _
    $region55: #{tpu_custom_call.1} parent=1 // pred_check_branch
      %1302 = sbr.rel (0) target = $region57
    $region56: #{tpu_custom_call.1} parent=1 // pred_region
      %s1304 = ssub.s32 2048, 2048
      %1305 = vsyncadd [#allocation3], %s1304
      %s1306 = sshll.u32 [#allocation2], 4
      %s1307 = int_to_ptr.vmem [resolvable:$true] %s1306
      %1312 = dma.vmem_to_hbm [thread:$0]  %s1307, 2048, %s13, [#allocation3], 512, 512, 32
    $region57: #{tpu_custom_call.1} parent=1 // pred_fallthru
      _
    // Predicated region
    $region58: #{tpu_custom_call.1} parent=1 // pred_check
      _
    $region59: #{tpu_custom_call.1} parent=1 // pred_check_branch
      %1314 = sbr.rel (0) target = $region61
    $region60: #{tpu_custom_call.1} parent=1 // pred_region
      %1315 = dma.done [#allocation3], 2048
    $region61: #{tpu_custom_call.1} parent=1 // pred_fallthru
      _
    %1316 = vsyncpa [#allocation3], 1

</llo_original>
